<compile_context>
chip_gen: v5e
topology: v5e:2x2
jax: 0.10.0
libtpu: 0.0.40
codegen_flags: <defaults>
</compile_context>

<pallas_src>
import functools

import jax
import jax.numpy as jnp
import numpy as np
from jax import lax
from jax.experimental import pallas as pl
from jax.experimental.pallas import tpu as pltpu


def _separable_conv2d_kernel(x_ref, dw_ref, pw_ref, o_ref, pad_ref, *,
                             KH, KW, Cin, Cout, stride, dilation, padding,
                             H, W, TH, Wout):
    """Fused depthwise + pointwise conv for one (batch, row-tile) grid step.

    x_ref:   (1, Cin, H, W)      un-padded input image (VMEM, resident across row tiles)
    dw_ref:  (Cin, KH*KW)        depthwise taps (SMEM scalars)
    pw_ref:  (Cout, Cin)         pointwise 1x1 weights (SMEM scalars)
    o_ref:   (1, Cout, TH, Wout) output row tile (W on the lane axis)
    pad_ref: (Cin, Hp, Wp)       f32 zero-padded image scratch (VMEM)
    """
    rt = pl.program_id(1)

    # ---- once per batch element: build the zero-padded image in VMEM scratch ----
    @pl.when(rt == 0)
    def _():
        if padding > 0:
            pad_ref[...] = jnp.zeros_like(pad_ref)
        for c in range(Cin):
            pad_ref[c, padding:padding + H, padding:padding + W] = (
                x_ref[0, c, :, :].astype(jnp.float32))

    # ---- hoisted scalar weight loads (SMEM -> scalar regs, off the vector path) ----
    dw_taps = [[[dw_ref[c, kh * KW + kw] for kw in range(KW)]
                for kh in range(KH)] for c in range(Cin)]
    pw_taps = [[pw_ref[co, c] for c in range(Cin)] for co in range(Cout)]

    th_in = (TH - 1) * stride + dilation * (KH - 1) + 1   # input rows incl. halo
    row0 = rt * (TH * stride)
    if (TH * stride) % 8 == 0:
        row0 = pl.multiple_of(row0, 8)

    # ---- depthwise conv: per-input-channel tap FMAs on the VPU ----
    dw_out = []
    for c in range(Cin):
        win = pad_ref[c, pl.ds(row0, th_in), :]           # (th_in, Wp) f32
        acc = None
        for kh in range(KH):
            for kw in range(KW):
                patch = lax.slice(
                    win,
                    (kh * dilation, kw * dilation),
                    (kh * dilation + (TH - 1) * stride + 1,
                     kw * dilation + (Wout - 1) * stride + 1),
                    (stride, stride))                     # (TH, Wout)
                term = patch * dw_taps[c][kh][kw]
                acc = term if acc is None else acc + term
        dw_out.append(acc)

    # ---- pointwise 1x1 conv: unrolled scalar * tile FMAs (channels are tiny) ----
    # TODO(synk): for Cin/Cout >= ~128, switch this branch to a Cout-tiled MXU matmul.
    for co in range(Cout):
        out = dw_out[0] * pw_taps[co][0]
        for c in range(1, Cin):
            out = out + dw_out[c] * pw_taps[co][c]
        o_ref[0, co, :, :] = out.astype(o_ref.dtype)


def _pick_row_tile(Hout, requested=None, max_tile=128):
    """Row-tile height: a multiple of 8 that divides Hout, or the whole height."""
    if requested is not None and Hout % requested == 0 and (
            requested % 8 == 0 or requested == Hout):
        return requested
    if Hout <= max_tile:
        return Hout
    best = None
    for th in range(8, max_tile + 1, 8):
        if Hout % th == 0:
            best = th
    return best if best is not None else Hout


def separable_conv2d(x_nchw, dw_weight, pw_weight, *,
                     stride=1, padding=0, dilation=1, row_tile=None):
    """x_nchw: (N, Cin, H, W). dw_weight: (Cin, 1, KH, KW) (PyTorch layout).
    pw_weight: (Cout, Cin, 1, 1) (PyTorch layout). Returns (N, Cout, Hout, Wout)."""
    N, Cin, H, W = map(int, x_nchw.shape)
    KH, KW = int(dw_weight.shape[2]), int(dw_weight.shape[3])
    Cout = int(pw_weight.shape[0])

    Hout = (H + 2 * padding - dilation * (KH - 1) - 1) // stride + 1
    Wout = (W + 2 * padding - dilation * (KW - 1) - 1) // stride + 1
    Hp, Wp = H + 2 * padding, W + 2 * padding

    TH = _pick_row_tile(Hout, row_tile)
    assert Hout % TH == 0, (Hout, TH)
    n_rt = Hout // TH

    # Weight repacking for SMEM scalar tables (PyTorch layouts -> f32).
    dw = dw_weight[:, 0, :, :].reshape(Cin, KH * KW).astype(jnp.float32)  # (Cin, KH*KW)
    pw = pw_weight[:, :, 0, 0].astype(jnp.float32)                        # (Cout, Cin)

    kernel = functools.partial(
        _separable_conv2d_kernel, KH=KH, KW=KW, Cin=Cin, Cout=Cout,
        stride=stride, dilation=dilation, padding=padding,
        H=H, W=W, TH=TH, Wout=Wout)

    itemsize = jnp.dtype(x_nchw.dtype).itemsize
    flops = 2 * N * Hout * Wout * Cin * (KH * KW + Cout)
    bytes_accessed = (N * Cin * H * W * itemsize
                      + N * Cout * Hout * Wout * itemsize
                      + Cin * KH * KW * 4 + Cout * Cin * 4)

    out = pl.pallas_call(
        kernel,
        out_shape=jax.ShapeDtypeStruct((N, Cout, Hout, Wout), x_nchw.dtype),
        grid=(N, n_rt),
        in_specs=[
            pl.BlockSpec((1, Cin, H, W), lambda n, rt: (n, 0, 0, 0)),
            pl.BlockSpec(memory_space=pltpu.MemorySpace.SMEM),
            pl.BlockSpec(memory_space=pltpu.MemorySpace.SMEM),
        ],
        out_specs=pl.BlockSpec((1, Cout, TH, Wout), lambda n, rt: (n, 0, rt, 0)),
        scratch_shapes=[pltpu.VMEM((Cin, Hp, Wp), jnp.float32)],
        compiler_params=pltpu.CompilerParams(
            dimension_semantics=("parallel", "arbitrary"),
            vmem_limit_bytes=32 * 1024 * 1024),
        cost_estimate=pl.CostEstimate(flops=flops, transcendentals=0,
                                      bytes_accessed=bytes_accessed),
    )(x_nchw, dw, pw)
    return out


def _reference(x_nchw, dw_weight, pw_weight, *, stride, padding, dilation):
    """Pure-JAX reference matching PyTorch Conv2d semantics."""
    Cin = x_nchw.shape[1]
    y = lax.conv_general_dilated(
        x_nchw, dw_weight,
        window_strides=(stride, stride),
        padding=[(padding, padding), (padding, padding)],
        rhs_dilation=(dilation, dilation),
        feature_group_count=Cin,
        dimension_numbers=("NCHW", "OIHW", "NCHW"))
    y = lax.conv_general_dilated(
        y, pw_weight,
        window_strides=(1, 1),
        padding=[(0, 0), (0, 0)],
        dimension_numbers=("NCHW", "OIHW", "NCHW"))
    return y


if __name__ == "__main__":
    key = jax.random.PRNGKey(0)

    def run_case(N, Cin, Cout, H, W, K, stride, padding, dilation, row_tile, k):
        kx, kdw, kpw = jax.random.split(k, 3)
        x = jax.random.normal(kx, (N, Cin, H, W), dtype=jnp.float32)
        dw_w = jax.random.normal(kdw, (Cin, 1, K, K), dtype=jnp.float32) * 0.1
        pw_w = jax.random.normal(kpw, (Cout, Cin, 1, 1), dtype=jnp.float32) * 0.1
        out = separable_conv2d(x, dw_w, pw_w, stride=stride, padding=padding,
                               dilation=dilation, row_tile=row_tile)
        out = jax.block_until_ready(out)
        ref = _reference(x, dw_w, pw_w, stride=stride, padding=padding,
                         dilation=dilation)
        ref = jax.block_until_ready(ref)
        assert out.shape == ref.shape, (out.shape, ref.shape)
        np.testing.assert_allclose(np.asarray(out), np.asarray(ref),
                                   rtol=1e-5, atol=1e-5)

    k1, k2 = jax.random.split(key)
    # SeparableConv2d(4, 8, kernel_size=3, stride=1, padding=1) on (2, 4, 16, 16);
    # row_tile=8 exercises the 2-row-tile pipelined grid + halo'd slicing.
    run_case(2, 4, 8, 16, 16, 3, 1, 1, 1, 8, k1)
    # Module defaults: kernel_size=1, stride=1, padding=0 (single row tile).
    run_case(2, 4, 8, 16, 16, 1, 1, 0, 1, None, k2)
    print("KERNEL_OK")
</pallas_src>

<mosaic_0001>
module attributes {stable_mosaic.version = 11 : i64} {
  func.func @_separable_conv2d_kernel(%arg0: i32, %arg1: i32, %arg2: memref<1x4x16x16xf32, #tpu.memory_space<vmem>>, %arg3: memref<4x9xf32, #tpu.memory_space<smem>>, %arg4: memref<8x4xf32, #tpu.memory_space<smem>>, %arg5: memref<1x8x8x16xf32, #tpu.memory_space<vmem>>, %arg6: memref<4x18x18xf32, #tpu.memory_space<vmem>>) attributes {dimension_semantics = [#tpu.dimension_semantics<parallel>, #tpu.dimension_semantics<arbitrary>], iteration_bounds = array<i64: 2, 2>, scalar_prefetch = 0 : i64, scratch_operands = 1 : i64, tpu.core_type = #tpu.core_type<tc>, window_params = [{transform_indices = @transform_0, window_bounds = array<i64: 1, 4, 16, 16>}, {transform_indices = @transform_1, window_bounds = array<i64: 4, 9>}, {transform_indices = @transform_2, window_bounds = array<i64: 8, 4>}, {transform_indices = @transform_3, window_bounds = array<i64: 1, 8, 8, 16>}]} {
    %c0_i32 = arith.constant 0 : i32
    %0 = arith.cmpi eq, %arg1, %c0_i32 : i32
    %1 = arith.extui %0 : i1 to i32
    %c0_i32_0 = arith.constant 0 : i32
    %2 = arith.cmpi ne, %1, %c0_i32_0 : i32
    scf.if %2 {
      %cst = arith.constant 0.000000e+00 : f32
      %337 = vector.broadcast %cst : f32 to vector<4x18x18xf32>
      %c0_168 = arith.constant 0 : index
      %c0_169 = arith.constant 0 : index
      %c0_170 = arith.constant 0 : index
      %338 = vector.load %arg6[%c0_168, %c0_169, %c0_170] : memref<4x18x18xf32, #tpu.memory_space<vmem>>, vector<4x18x18xf32>
      tpu.vector_store %arg6[%c0_168, %c0_169, %c0_170], %337 {strides = array<i32>} : memref<4x18x18xf32, #tpu.memory_space<vmem>>, vector<4x18x18xf32>,
      %c0_171 = arith.constant 0 : index
      %c0_172 = arith.constant 0 : index
      %c0_173 = arith.constant 0 : index
      %c0_174 = arith.constant 0 : index
      %339 = vector.load %arg2[%c0_171, %c0_172, %c0_173, %c0_174] : memref<1x4x16x16xf32, #tpu.memory_space<vmem>>, vector<1x1x16x16xf32>
      %340 = vector.shape_cast %339 : vector<1x1x16x16xf32> to vector<16x16xf32>
      %c0_175 = arith.constant 0 : index
      %c1_176 = arith.constant 1 : index
      %c1_177 = arith.constant 1 : index
      %341 = vector.load %arg6[%c0_175, %c1_176, %c1_177] : memref<4x18x18xf32, #tpu.memory_space<vmem>>, vector<1x16x16xf32>
      %342 = vector.shape_cast %341 : vector<1x16x16xf32> to vector<16x16xf32>
      %343 = vector.shape_cast %340 : vector<16x16xf32> to vector<1x16x16xf32>
      tpu.vector_store %arg6[%c0_175, %c1_176, %c1_177], %343 {strides = array<i32>} : memref<4x18x18xf32, #tpu.memory_space<vmem>>, vector<1x16x16xf32>,
      %c0_178 = arith.constant 0 : index
      %c1_179 = arith.constant 1 : index
      %c0_180 = arith.constant 0 : index
      %c0_181 = arith.constant 0 : index
      %344 = vector.load %arg2[%c0_178, %c1_179, %c0_180, %c0_181] : memref<1x4x16x16xf32, #tpu.memory_space<vmem>>, vector<1x1x16x16xf32>
      %345 = vector.shape_cast %344 : vector<1x1x16x16xf32> to vector<16x16xf32>
      %c1_182 = arith.constant 1 : index
      %c1_183 = arith.constant 1 : index
      %c1_184 = arith.constant 1 : index
      %346 = vector.load %arg6[%c1_182, %c1_183, %c1_184] : memref<4x18x18xf32, #tpu.memory_space<vmem>>, vector<1x16x16xf32>
      %347 = vector.shape_cast %346 : vector<1x16x16xf32> to vector<16x16xf32>
      %348 = vector.shape_cast %345 : vector<16x16xf32> to vector<1x16x16xf32>
      tpu.vector_store %arg6[%c1_182, %c1_183, %c1_184], %348 {strides = array<i32>} : memref<4x18x18xf32, #tpu.memory_space<vmem>>, vector<1x16x16xf32>,
      %c0_185 = arith.constant 0 : index
      %c2_186 = arith.constant 2 : index
      %c0_187 = arith.constant 0 : index
      %c0_188 = arith.constant 0 : index
      %349 = vector.load %arg2[%c0_185, %c2_186, %c0_187, %c0_188] : memref<1x4x16x16xf32, #tpu.memory_space<vmem>>, vector<1x1x16x16xf32>
      %350 = vector.shape_cast %349 : vector<1x1x16x16xf32> to vector<16x16xf32>
      %c2_189 = arith.constant 2 : index
      %c1_190 = arith.constant 1 : index
      %c1_191 = arith.constant 1 : index
      %351 = vector.load %arg6[%c2_189, %c1_190, %c1_191] : memref<4x18x18xf32, #tpu.memory_space<vmem>>, vector<1x16x16xf32>
      %352 = vector.shape_cast %351 : vector<1x16x16xf32> to vector<16x16xf32>
      %353 = vector.shape_cast %350 : vector<16x16xf32> to vector<1x16x16xf32>
      tpu.vector_store %arg6[%c2_189, %c1_190, %c1_191], %353 {strides = array<i32>} : memref<4x18x18xf32, #tpu.memory_space<vmem>>, vector<1x16x16xf32>,
      %c0_192 = arith.constant 0 : index
      %c3_193 = arith.constant 3 : index
      %c0_194 = arith.constant 0 : index
      %c0_195 = arith.constant 0 : index
      %354 = vector.load %arg2[%c0_192, %c3_193, %c0_194, %c0_195] : memref<1x4x16x16xf32, #tpu.memory_space<vmem>>, vector<1x1x16x16xf32>
      %355 = vector.shape_cast %354 : vector<1x1x16x16xf32> to vector<16x16xf32>
      %c3_196 = arith.constant 3 : index
      %c1_197 = arith.constant 1 : index
      %c1_198 = arith.constant 1 : index
      %356 = vector.load %arg6[%c3_196, %c1_197, %c1_198] : memref<4x18x18xf32, #tpu.memory_space<vmem>>, vector<1x16x16xf32>
      %357 = vector.shape_cast %356 : vector<1x16x16xf32> to vector<16x16xf32>
      %358 = vector.shape_cast %355 : vector<16x16xf32> to vector<1x16x16xf32>
      tpu.vector_store %arg6[%c3_196, %c1_197, %c1_198], %358 {strides = array<i32>} : memref<4x18x18xf32, #tpu.memory_space<vmem>>, vector<1x16x16xf32>,
    } else {
    }
    %c0 = arith.constant 0 : index
    %c0_1 = arith.constant 0 : index
    %3 = memref.load %arg3[%c0, %c0_1] : memref<4x9xf32, #tpu.memory_space<smem>>
    %c0_2 = arith.constant 0 : index
    %c1 = arith.constant 1 : index
    %4 = memref.load %arg3[%c0_2, %c1] : memref<4x9xf32, #tpu.memory_space<smem>>
    %c0_3 = arith.constant 0 : index
    %c2 = arith.constant 2 : index
    %5 = memref.load %arg3[%c0_3, %c2] : memref<4x9xf32, #tpu.memory_space<smem>>
    %c0_4 = arith.constant 0 : index
    %c3 = arith.constant 3 : index
    %6 = memref.load %arg3[%c0_4, %c3] : memref<4x9xf32, #tpu.memory_space<smem>>
    %c0_5 = arith.constant 0 : index
    %c4 = arith.constant 4 : index
    %7 = memref.load %arg3[%c0_5, %c4] : memref<4x9xf32, #tpu.memory_space<smem>>
    %c0_6 = arith.constant 0 : index
    %c5 = arith.constant 5 : index
    %8 = memref.load %arg3[%c0_6, %c5] : memref<4x9xf32, #tpu.memory_space<smem>>
    %c0_7 = arith.constant 0 : index
    %c6 = arith.constant 6 : index
    %9 = memref.load %arg3[%c0_7, %c6] : memref<4x9xf32, #tpu.memory_space<smem>>
    %c0_8 = arith.constant 0 : index
    %c7 = arith.constant 7 : index
    %10 = memref.load %arg3[%c0_8, %c7] : memref<4x9xf32, #tpu.memory_space<smem>>
    %c0_9 = arith.constant 0 : index
    %c8 = arith.constant 8 : index
    %11 = memref.load %arg3[%c0_9, %c8] : memref<4x9xf32, #tpu.memory_space<smem>>
    %c1_10 = arith.constant 1 : index
    %c0_11 = arith.constant 0 : index
    %12 = memref.load %arg3[%c1_10, %c0_11] : memref<4x9xf32, #tpu.memory_space<smem>>
    %c1_12 = arith.constant 1 : index
    %c1_13 = arith.constant 1 : index
    %13 = memref.load %arg3[%c1_12, %c1_13] : memref<4x9xf32, #tpu.memory_space<smem>>
    %c1_14 = arith.constant 1 : index
    %c2_15 = arith.constant 2 : index
    %14 = memref.load %arg3[%c1_14, %c2_15] : memref<4x9xf32, #tpu.memory_space<smem>>
    %c1_16 = arith.constant 1 : index
    %c3_17 = arith.constant 3 : index
    %15 = memref.load %arg3[%c1_16, %c3_17] : memref<4x9xf32, #tpu.memory_space<smem>>
    %c1_18 = arith.constant 1 : index
    %c4_19 = arith.constant 4 : index
    %16 = memref.load %arg3[%c1_18, %c4_19] : memref<4x9xf32, #tpu.memory_space<smem>>
    %c1_20 = arith.constant 1 : index
    %c5_21 = arith.constant 5 : index
    %17 = memref.load %arg3[%c1_20, %c5_21] : memref<4x9xf32, #tpu.memory_space<smem>>
    %c1_22 = arith.constant 1 : index
    %c6_23 = arith.constant 6 : index
    %18 = memref.load %arg3[%c1_22, %c6_23] : memref<4x9xf32, #tpu.memory_space<smem>>
    %c1_24 = arith.constant 1 : index
    %c7_25 = arith.constant 7 : index
    %19 = memref.load %arg3[%c1_24, %c7_25] : memref<4x9xf32, #tpu.memory_space<smem>>
    %c1_26 = arith.constant 1 : index
    %c8_27 = arith.constant 8 : index
    %20 = memref.load %arg3[%c1_26, %c8_27] : memref<4x9xf32, #tpu.memory_space<smem>>
    %c2_28 = arith.constant 2 : index
    %c0_29 = arith.constant 0 : index
    %21 = memref.load %arg3[%c2_28, %c0_29] : memref<4x9xf32, #tpu.memory_space<smem>>
    %c2_30 = arith.constant 2 : index
    %c1_31 = arith.constant 1 : index
    %22 = memref.load %arg3[%c2_30, %c1_31] : memref<4x9xf32, #tpu.memory_space<smem>>
    %c2_32 = arith.constant 2 : index
    %c2_33 = arith.constant 2 : index
    %23 = memref.load %arg3[%c2_32, %c2_33] : memref<4x9xf32, #tpu.memory_space<smem>>
    %c2_34 = arith.constant 2 : index
    %c3_35 = arith.constant 3 : index
    %24 = memref.load %arg3[%c2_34, %c3_35] : memref<4x9xf32, #tpu.memory_space<smem>>
    %c2_36 = arith.constant 2 : index
    %c4_37 = arith.constant 4 : index
    %25 = memref.load %arg3[%c2_36, %c4_37] : memref<4x9xf32, #tpu.memory_space<smem>>
    %c2_38 = arith.constant 2 : index
    %c5_39 = arith.constant 5 : index
    %26 = memref.load %arg3[%c2_38, %c5_39] : memref<4x9xf32, #tpu.memory_space<smem>>
    %c2_40 = arith.constant 2 : index
    %c6_41 = arith.constant 6 : index
    %27 = memref.load %arg3[%c2_40, %c6_41] : memref<4x9xf32, #tpu.memory_space<smem>>
    %c2_42 = arith.constant 2 : index
    %c7_43 = arith.constant 7 : index
    %28 = memref.load %arg3[%c2_42, %c7_43] : memref<4x9xf32, #tpu.memory_space<smem>>
    %c2_44 = arith.constant 2 : index
    %c8_45 = arith.constant 8 : index
    %29 = memref.load %arg3[%c2_44, %c8_45] : memref<4x9xf32, #tpu.memory_space<smem>>
    %c3_46 = arith.constant 3 : index
    %c0_47 = arith.constant 0 : index
    %30 = memref.load %arg3[%c3_46, %c0_47] : memref<4x9xf32, #tpu.memory_space<smem>>
    %c3_48 = arith.constant 3 : index
    %c1_49 = arith.constant 1 : index
    %31 = memref.load %arg3[%c3_48, %c1_49] : memref<4x9xf32, #tpu.memory_space<smem>>
    %c3_50 = arith.constant 3 : index
    %c2_51 = arith.constant 2 : index
    %32 = memref.load %arg3[%c3_50, %c2_51] : memref<4x9xf32, #tpu.memory_space<smem>>
    %c3_52 = arith.constant 3 : index
    %c3_53 = arith.constant 3 : index
    %33 = memref.load %arg3[%c3_52, %c3_53] : memref<4x9xf32, #tpu.memory_space<smem>>
    %c3_54 = arith.constant 3 : index
    %c4_55 = arith.constant 4 : index
    %34 = memref.load %arg3[%c3_54, %c4_55] : memref<4x9xf32, #tpu.memory_space<smem>>
    %c3_56 = arith.constant 3 : index
    %c5_57 = arith.constant 5 : index
    %35 = memref.load %arg3[%c3_56, %c5_57] : memref<4x9xf32, #tpu.memory_space<smem>>
    %c3_58 = arith.constant 3 : index
    %c6_59 = arith.constant 6 : index
    %36 = memref.load %arg3[%c3_58, %c6_59] : memref<4x9xf32, #tpu.memory_space<smem>>
    %c3_60 = arith.constant 3 : index
    %c7_61 = arith.constant 7 : index
    %37 = memref.load %arg3[%c3_60, %c7_61] : memref<4x9xf32, #tpu.memory_space<smem>>
    %c3_62 = arith.constant 3 : index
    %c8_63 = arith.constant 8 : index
    %38 = memref.load %arg3[%c3_62, %c8_63] : memref<4x9xf32, #tpu.memory_space<smem>>
    %c0_64 = arith.constant 0 : index
    %c0_65 = arith.constant 0 : index
    %39 = memref.load %arg4[%c0_64, %c0_65] : memref<8x4xf32, #tpu.memory_space<smem>>
    %c0_66 = arith.constant 0 : index
    %c1_67 = arith.constant 1 : index
    %40 = memref.load %arg4[%c0_66, %c1_67] : memref<8x4xf32, #tpu.memory_space<smem>>
    %c0_68 = arith.constant 0 : index
    %c2_69 = arith.constant 2 : index
    %41 = memref.load %arg4[%c0_68, %c2_69] : memref<8x4xf32, #tpu.memory_space<smem>>
    %c0_70 = arith.constant 0 : index
    %c3_71 = arith.constant 3 : index
    %42 = memref.load %arg4[%c0_70, %c3_71] : memref<8x4xf32, #tpu.memory_space<smem>>
    %c1_72 = arith.constant 1 : index
    %c0_73 = arith.constant 0 : index
    %43 = memref.load %arg4[%c1_72, %c0_73] : memref<8x4xf32, #tpu.memory_space<smem>>
    %c1_74 = arith.constant 1 : index
    %c1_75 = arith.constant 1 : index
    %44 = memref.load %arg4[%c1_74, %c1_75] : memref<8x4xf32, #tpu.memory_space<smem>>
    %c1_76 = arith.constant 1 : index
    %c2_77 = arith.constant 2 : index
    %45 = memref.load %arg4[%c1_76, %c2_77] : memref<8x4xf32, #tpu.memory_space<smem>>
    %c1_78 = arith.constant 1 : index
    %c3_79 = arith.constant 3 : index
    %46 = memref.load %arg4[%c1_78, %c3_79] : memref<8x4xf32, #tpu.memory_space<smem>>
    %c2_80 = arith.constant 2 : index
    %c0_81 = arith.constant 0 : index
    %47 = memref.load %arg4[%c2_80, %c0_81] : memref<8x4xf32, #tpu.memory_space<smem>>
    %c2_82 = arith.constant 2 : index
    %c1_83 = arith.constant 1 : index
    %48 = memref.load %arg4[%c2_82, %c1_83] : memref<8x4xf32, #tpu.memory_space<smem>>
    %c2_84 = arith.constant 2 : index
    %c2_85 = arith.constant 2 : index
    %49 = memref.load %arg4[%c2_84, %c2_85] : memref<8x4xf32, #tpu.memory_space<smem>>
    %c2_86 = arith.constant 2 : index
    %c3_87 = arith.constant 3 : index
    %50 = memref.load %arg4[%c2_86, %c3_87] : memref<8x4xf32, #tpu.memory_space<smem>>
    %c3_88 = arith.constant 3 : index
    %c0_89 = arith.constant 0 : index
    %51 = memref.load %arg4[%c3_88, %c0_89] : memref<8x4xf32, #tpu.memory_space<smem>>
    %c3_90 = arith.constant 3 : index
    %c1_91 = arith.constant 1 : index
    %52 = memref.load %arg4[%c3_90, %c1_91] : memref<8x4xf32, #tpu.memory_space<smem>>
    %c3_92 = arith.constant 3 : index
    %c2_93 = arith.constant 2 : index
    %53 = memref.load %arg4[%c3_92, %c2_93] : memref<8x4xf32, #tpu.memory_space<smem>>
    %c3_94 = arith.constant 3 : index
    %c3_95 = arith.constant 3 : index
    %54 = memref.load %arg4[%c3_94, %c3_95] : memref<8x4xf32, #tpu.memory_space<smem>>
    %c4_96 = arith.constant 4 : index
    %c0_97 = arith.constant 0 : index
    %55 = memref.load %arg4[%c4_96, %c0_97] : memref<8x4xf32, #tpu.memory_space<smem>>
    %c4_98 = arith.constant 4 : index
    %c1_99 = arith.constant 1 : index
    %56 = memref.load %arg4[%c4_98, %c1_99] : memref<8x4xf32, #tpu.memory_space<smem>>
    %c4_100 = arith.constant 4 : index
    %c2_101 = arith.constant 2 : index
    %57 = memref.load %arg4[%c4_100, %c2_101] : memref<8x4xf32, #tpu.memory_space<smem>>
    %c4_102 = arith.constant 4 : index
    %c3_103 = arith.constant 3 : index
    %58 = memref.load %arg4[%c4_102, %c3_103] : memref<8x4xf32, #tpu.memory_space<smem>>
    %c5_104 = arith.constant 5 : index
    %c0_105 = arith.constant 0 : index
    %59 = memref.load %arg4[%c5_104, %c0_105] : memref<8x4xf32, #tpu.memory_space<smem>>
    %c5_106 = arith.constant 5 : index
    %c1_107 = arith.constant 1 : index
    %60 = memref.load %arg4[%c5_106, %c1_107] : memref<8x4xf32, #tpu.memory_space<smem>>
    %c5_108 = arith.constant 5 : index
    %c2_109 = arith.constant 2 : index
    %61 = memref.load %arg4[%c5_108, %c2_109] : memref<8x4xf32, #tpu.memory_space<smem>>
    %c5_110 = arith.constant 5 : index
    %c3_111 = arith.constant 3 : index
    %62 = memref.load %arg4[%c5_110, %c3_111] : memref<8x4xf32, #tpu.memory_space<smem>>
    %c6_112 = arith.constant 6 : index
    %c0_113 = arith.constant 0 : index
    %63 = memref.load %arg4[%c6_112, %c0_113] : memref<8x4xf32, #tpu.memory_space<smem>>
    %c6_114 = arith.constant 6 : index
    %c1_115 = arith.constant 1 : index
    %64 = memref.load %arg4[%c6_114, %c1_115] : memref<8x4xf32, #tpu.memory_space<smem>>
    %c6_116 = arith.constant 6 : index
    %c2_117 = arith.constant 2 : index
    %65 = memref.load %arg4[%c6_116, %c2_117] : memref<8x4xf32, #tpu.memory_space<smem>>
    %c6_118 = arith.constant 6 : index
    %c3_119 = arith.constant 3 : index
    %66 = memref.load %arg4[%c6_118, %c3_119] : memref<8x4xf32, #tpu.memory_space<smem>>
    %c7_120 = arith.constant 7 : index
    %c0_121 = arith.constant 0 : index
    %67 = memref.load %arg4[%c7_120, %c0_121] : memref<8x4xf32, #tpu.memory_space<smem>>
    %c7_122 = arith.constant 7 : index
    %c1_123 = arith.constant 1 : index
    %68 = memref.load %arg4[%c7_122, %c1_123] : memref<8x4xf32, #tpu.memory_space<smem>>
    %c7_124 = arith.constant 7 : index
    %c2_125 = arith.constant 2 : index
    %69 = memref.load %arg4[%c7_124, %c2_125] : memref<8x4xf32, #tpu.memory_space<smem>>
    %c7_126 = arith.constant 7 : index
    %c3_127 = arith.constant 3 : index
    %70 = memref.load %arg4[%c7_126, %c3_127] : memref<8x4xf32, #tpu.memory_space<smem>>
    %c8_i32 = arith.constant 8 : i32
    %71 = arith.muli %arg1, %c8_i32 : i32
    %72 = tpu.assume_multiple %71, 8 : i32
    %c0_128 = arith.constant 0 : index
    %73 = arith.index_cast %72 : i32 to index
    %c0_129 = arith.constant 0 : index
    %74 = vector.load %arg6[%c0_128, %73, %c0_129] : memref<4x18x18xf32, #tpu.memory_space<vmem>>, vector<1x10x18xf32>
    %75 = vector.shape_cast %74 : vector<1x10x18xf32> to vector<10x18xf32>
    %76 = vector.extract_strided_slice %75 {offsets = [0, 0], sizes = [8, 16], strides = [1, 1]} : vector<10x18xf32> to vector<8x16xf32>
    %77 = vector.broadcast %3 : f32 to vector<8x16xf32>
    %78 = arith.mulf %76, %77 : vector<8x16xf32>
    %79 = vector.extract_strided_slice %75 {offsets = [0, 1], sizes = [8, 16], strides = [1, 1]} : vector<10x18xf32> to vector<8x16xf32>
    %80 = vector.broadcast %4 : f32 to vector<8x16xf32>
    %81 = arith.mulf %79, %80 : vector<8x16xf32>
    %82 = arith.addf %78, %81 : vector<8x16xf32>
    %83 = vector.extract_strided_slice %75 {offsets = [0, 2], sizes = [8, 16], strides = [1, 1]} : vector<10x18xf32> to vector<8x16xf32>
    %84 = vector.broadcast %5 : f32 to vector<8x16xf32>
    %85 = arith.mulf %83, %84 : vector<8x16xf32>
    %86 = arith.addf %82, %85 : vector<8x16xf32>
    %87 = vector.extract_strided_slice %75 {offsets = [1, 0], sizes = [8, 16], strides = [1, 1]} : vector<10x18xf32> to vector<8x16xf32>
    %88 = vector.broadcast %6 : f32 to vector<8x16xf32>
    %89 = arith.mulf %87, %88 : vector<8x16xf32>
    %90 = arith.addf %86, %89 : vector<8x16xf32>
    %91 = vector.extract_strided_slice %75 {offsets = [1, 1], sizes = [8, 16], strides = [1, 1]} : vector<10x18xf32> to vector<8x16xf32>
    %92 = vector.broadcast %7 : f32 to vector<8x16xf32>
    %93 = arith.mulf %91, %92 : vector<8x16xf32>
    %94 = arith.addf %90, %93 : vector<8x16xf32>
    %95 = vector.extract_strided_slice %75 {offsets = [1, 2], sizes = [8, 16], strides = [1, 1]} : vector<10x18xf32> to vector<8x16xf32>
    %96 = vector.broadcast %8 : f32 to vector<8x16xf32>
    %97 = arith.mulf %95, %96 : vector<8x16xf32>
    %98 = arith.addf %94, %97 : vector<8x16xf32>
    %99 = vector.extract_strided_slice %75 {offsets = [2, 0], sizes = [8, 16], strides = [1, 1]} : vector<10x18xf32> to vector<8x16xf32>
    %100 = vector.broadcast %9 : f32 to vector<8x16xf32>
    %101 = arith.mulf %99, %100 : vector<8x16xf32>
    %102 = arith.addf %98, %101 : vector<8x16xf32>
    %103 = vector.extract_strided_slice %75 {offsets = [2, 1], sizes = [8, 16], strides = [1, 1]} : vector<10x18xf32> to vector<8x16xf32>
    %104 = vector.broadcast %10 : f32 to vector<8x16xf32>
    %105 = arith.mulf %103, %104 : vector<8x16xf32>
    %106 = arith.addf %102, %105 : vector<8x16xf32>
    %107 = vector.extract_strided_slice %75 {offsets = [2, 2], sizes = [8, 16], strides = [1, 1]} : vector<10x18xf32> to vector<8x16xf32>
    %108 = vector.broadcast %11 : f32 to vector<8x16xf32>
    %109 = arith.mulf %107, %108 : vector<8x16xf32>
    %110 = arith.addf %106, %109 : vector<8x16xf32>
    %c1_130 = arith.constant 1 : index
    %111 = arith.index_cast %72 : i32 to index
    %c0_131 = arith.constant 0 : index
    %112 = vector.load %arg6[%c1_130, %111, %c0_131] : memref<4x18x18xf32, #tpu.memory_space<vmem>>, vector<1x10x18xf32>
    %113 = vector.shape_cast %112 : vector<1x10x18xf32> to vector<10x18xf32>
    %114 = vector.extract_strided_slice %113 {offsets = [0, 0], sizes = [8, 16], strides = [1, 1]} : vector<10x18xf32> to vector<8x16xf32>
    %115 = vector.broadcast %12 : f32 to vector<8x16xf32>
    %116 = arith.mulf %114, %115 : vector<8x16xf32>
    %117 = vector.extract_strided_slice %113 {offsets = [0, 1], sizes = [8, 16], strides = [1, 1]} : vector<10x18xf32> to vector<8x16xf32>
    %118 = vector.broadcast %13 : f32 to vector<8x16xf32>
    %119 = arith.mulf %117, %118 : vector<8x16xf32>
    %120 = arith.addf %116, %119 : vector<8x16xf32>
    %121 = vector.extract_strided_slice %113 {offsets = [0, 2], sizes = [8, 16], strides = [1, 1]} : vector<10x18xf32> to vector<8x16xf32>
    %122 = vector.broadcast %14 : f32 to vector<8x16xf32>
    %123 = arith.mulf %121, %122 : vector<8x16xf32>
    %124 = arith.addf %120, %123 : vector<8x16xf32>
    %125 = vector.extract_strided_slice %113 {offsets = [1, 0], sizes = [8, 16], strides = [1, 1]} : vector<10x18xf32> to vector<8x16xf32>
    %126 = vector.broadcast %15 : f32 to vector<8x16xf32>
    %127 = arith.mulf %125, %126 : vector<8x16xf32>
    %128 = arith.addf %124, %127 : vector<8x16xf32>
    %129 = vector.extract_strided_slice %113 {offsets = [1, 1], sizes = [8, 16], strides = [1, 1]} : vector<10x18xf32> to vector<8x16xf32>
    %130 = vector.broadcast %16 : f32 to vector<8x16xf32>
    %131 = arith.mulf %129, %130 : vector<8x16xf32>
    %132 = arith.addf %128, %131 : vector<8x16xf32>
    %133 = vector.extract_strided_slice %113 {offsets = [1, 2], sizes = [8, 16], strides = [1, 1]} : vector<10x18xf32> to vector<8x16xf32>
    %134 = vector.broadcast %17 : f32 to vector<8x16xf32>
    %135 = arith.mulf %133, %134 : vector<8x16xf32>
    %136 = arith.addf %132, %135 : vector<8x16xf32>
    %137 = vector.extract_strided_slice %113 {offsets = [2, 0], sizes = [8, 16], strides = [1, 1]} : vector<10x18xf32> to vector<8x16xf32>
    %138 = vector.broadcast %18 : f32 to vector<8x16xf32>
    %139 = arith.mulf %137, %138 : vector<8x16xf32>
    %140 = arith.addf %136, %139 : vector<8x16xf32>
    %141 = vector.extract_strided_slice %113 {offsets = [2, 1], sizes = [8, 16], strides = [1, 1]} : vector<10x18xf32> to vector<8x16xf32>
    %142 = vector.broadcast %19 : f32 to vector<8x16xf32>
    %143 = arith.mulf %141, %142 : vector<8x16xf32>
    %144 = arith.addf %140, %143 : vector<8x16xf32>
    %145 = vector.extract_strided_slice %113 {offsets = [2, 2], sizes = [8, 16], strides = [1, 1]} : vector<10x18xf32> to vector<8x16xf32>
    %146 = vector.broadcast %20 : f32 to vector<8x16xf32>
    %147 = arith.mulf %145, %146 : vector<8x16xf32>
    %148 = arith.addf %144, %147 : vector<8x16xf32>
    %c2_132 = arith.constant 2 : index
    %149 = arith.index_cast %72 : i32 to index
    %c0_133 = arith.constant 0 : index
    %150 = vector.load %arg6[%c2_132, %149, %c0_133] : memref<4x18x18xf32, #tpu.memory_space<vmem>>, vector<1x10x18xf32>
    %151 = vector.shape_cast %150 : vector<1x10x18xf32> to vector<10x18xf32>
    %152 = vector.extract_strided_slice %151 {offsets = [0, 0], sizes = [8, 16], strides = [1, 1]} : vector<10x18xf32> to vector<8x16xf32>
    %153 = vector.broadcast %21 : f32 to vector<8x16xf32>
    %154 = arith.mulf %152, %153 : vector<8x16xf32>
    %155 = vector.extract_strided_slice %151 {offsets = [0, 1], sizes = [8, 16], strides = [1, 1]} : vector<10x18xf32> to vector<8x16xf32>
    %156 = vector.broadcast %22 : f32 to vector<8x16xf32>
    %157 = arith.mulf %155, %156 : vector<8x16xf32>
    %158 = arith.addf %154, %157 : vector<8x16xf32>
    %159 = vector.extract_strided_slice %151 {offsets = [0, 2], sizes = [8, 16], strides = [1, 1]} : vector<10x18xf32> to vector<8x16xf32>
    %160 = vector.broadcast %23 : f32 to vector<8x16xf32>
    %161 = arith.mulf %159, %160 : vector<8x16xf32>
    %162 = arith.addf %158, %161 : vector<8x16xf32>
    %163 = vector.extract_strided_slice %151 {offsets = [1, 0], sizes = [8, 16], strides = [1, 1]} : vector<10x18xf32> to vector<8x16xf32>
    %164 = vector.broadcast %24 : f32 to vector<8x16xf32>
    %165 = arith.mulf %163, %164 : vector<8x16xf32>
    %166 = arith.addf %162, %165 : vector<8x16xf32>
    %167 = vector.extract_strided_slice %151 {offsets = [1, 1], sizes = [8, 16], strides = [1, 1]} : vector<10x18xf32> to vector<8x16xf32>
    %168 = vector.broadcast %25 : f32 to vector<8x16xf32>
    %169 = arith.mulf %167, %168 : vector<8x16xf32>
    %170 = arith.addf %166, %169 : vector<8x16xf32>
    %171 = vector.extract_strided_slice %151 {offsets = [1, 2], sizes = [8, 16], strides = [1, 1]} : vector<10x18xf32> to vector<8x16xf32>
    %172 = vector.broadcast %26 : f32 to vector<8x16xf32>
    %173 = arith.mulf %171, %172 : vector<8x16xf32>
    %174 = arith.addf %170, %173 : vector<8x16xf32>
    %175 = vector.extract_strided_slice %151 {offsets = [2, 0], sizes = [8, 16], strides = [1, 1]} : vector<10x18xf32> to vector<8x16xf32>
    %176 = vector.broadcast %27 : f32 to vector<8x16xf32>
    %177 = arith.mulf %175, %176 : vector<8x16xf32>
    %178 = arith.addf %174, %177 : vector<8x16xf32>
    %179 = vector.extract_strided_slice %151 {offsets = [2, 1], sizes = [8, 16], strides = [1, 1]} : vector<10x18xf32> to vector<8x16xf32>
    %180 = vector.broadcast %28 : f32 to vector<8x16xf32>
    %181 = arith.mulf %179, %180 : vector<8x16xf32>
    %182 = arith.addf %178, %181 : vector<8x16xf32>
    %183 = vector.extract_strided_slice %151 {offsets = [2, 2], sizes = [8, 16], strides = [1, 1]} : vector<10x18xf32> to vector<8x16xf32>
    %184 = vector.broadcast %29 : f32 to vector<8x16xf32>
    %185 = arith.mulf %183, %184 : vector<8x16xf32>
    %186 = arith.addf %182, %185 : vector<8x16xf32>
    %c3_134 = arith.constant 3 : index
    %187 = arith.index_cast %72 : i32 to index
    %c0_135 = arith.constant 0 : index
    %188 = vector.load %arg6[%c3_134, %187, %c0_135] : memref<4x18x18xf32, #tpu.memory_space<vmem>>, vector<1x10x18xf32>
    %189 = vector.shape_cast %188 : vector<1x10x18xf32> to vector<10x18xf32>
    %190 = vector.extract_strided_slice %189 {offsets = [0, 0], sizes = [8, 16], strides = [1, 1]} : vector<10x18xf32> to vector<8x16xf32>
    %191 = vector.broadcast %30 : f32 to vector<8x16xf32>
    %192 = arith.mulf %190, %191 : vector<8x16xf32>
    %193 = vector.extract_strided_slice %189 {offsets = [0, 1], sizes = [8, 16], strides = [1, 1]} : vector<10x18xf32> to vector<8x16xf32>
    %194 = vector.broadcast %31 : f32 to vector<8x16xf32>
    %195 = arith.mulf %193, %194 : vector<8x16xf32>
    %196 = arith.addf %192, %195 : vector<8x16xf32>
    %197 = vector.extract_strided_slice %189 {offsets = [0, 2], sizes = [8, 16], strides = [1, 1]} : vector<10x18xf32> to vector<8x16xf32>
    %198 = vector.broadcast %32 : f32 to vector<8x16xf32>
    %199 = arith.mulf %197, %198 : vector<8x16xf32>
    %200 = arith.addf %196, %199 : vector<8x16xf32>
    %201 = vector.extract_strided_slice %189 {offsets = [1, 0], sizes = [8, 16], strides = [1, 1]} : vector<10x18xf32> to vector<8x16xf32>
    %202 = vector.broadcast %33 : f32 to vector<8x16xf32>
    %203 = arith.mulf %201, %202 : vector<8x16xf32>
    %204 = arith.addf %200, %203 : vector<8x16xf32>
    %205 = vector.extract_strided_slice %189 {offsets = [1, 1], sizes = [8, 16], strides = [1, 1]} : vector<10x18xf32> to vector<8x16xf32>
    %206 = vector.broadcast %34 : f32 to vector<8x16xf32>
    %207 = arith.mulf %205, %206 : vector<8x16xf32>
    %208 = arith.addf %204, %207 : vector<8x16xf32>
    %209 = vector.extract_strided_slice %189 {offsets = [1, 2], sizes = [8, 16], strides = [1, 1]} : vector<10x18xf32> to vector<8x16xf32>
    %210 = vector.broadcast %35 : f32 to vector<8x16xf32>
    %211 = arith.mulf %209, %210 : vector<8x16xf32>
    %212 = arith.addf %208, %211 : vector<8x16xf32>
    %213 = vector.extract_strided_slice %189 {offsets = [2, 0], sizes = [8, 16], strides = [1, 1]} : vector<10x18xf32> to vector<8x16xf32>
    %214 = vector.broadcast %36 : f32 to vector<8x16xf32>
    %215 = arith.mulf %213, %214 : vector<8x16xf32>
    %216 = arith.addf %212, %215 : vector<8x16xf32>
    %217 = vector.extract_strided_slice %189 {offsets = [2, 1], sizes = [8, 16], strides = [1, 1]} : vector<10x18xf32> to vector<8x16xf32>
    %218 = vector.broadcast %37 : f32 to vector<8x16xf32>
    %219 = arith.mulf %217, %218 : vector<8x16xf32>
    %220 = arith.addf %216, %219 : vector<8x16xf32>
    %221 = vector.extract_strided_slice %189 {offsets = [2, 2], sizes = [8, 16], strides = [1, 1]} : vector<10x18xf32> to vector<8x16xf32>
    %222 = vector.broadcast %38 : f32 to vector<8x16xf32>
    %223 = arith.mulf %221, %222 : vector<8x16xf32>
    %224 = arith.addf %220, %223 : vector<8x16xf32>
    %225 = vector.broadcast %39 : f32 to vector<8x16xf32>
    %226 = arith.mulf %110, %225 : vector<8x16xf32>
    %227 = vector.broadcast %40 : f32 to vector<8x16xf32>
    %228 = arith.mulf %148, %227 : vector<8x16xf32>
    %229 = arith.addf %226, %228 : vector<8x16xf32>
    %230 = vector.broadcast %41 : f32 to vector<8x16xf32>
    %231 = arith.mulf %186, %230 : vector<8x16xf32>
    %232 = arith.addf %229, %231 : vector<8x16xf32>
    %233 = vector.broadcast %42 : f32 to vector<8x16xf32>
    %234 = arith.mulf %224, %233 : vector<8x16xf32>
    %235 = arith.addf %232, %234 : vector<8x16xf32>
    %c0_136 = arith.constant 0 : index
    %c0_137 = arith.constant 0 : index
    %c0_138 = arith.constant 0 : index
    %c0_139 = arith.constant 0 : index
    %236 = vector.load %arg5[%c0_136, %c0_137, %c0_138, %c0_139] : memref<1x8x8x16xf32, #tpu.memory_space<vmem>>, vector<1x1x8x16xf32>
    %237 = vector.shape_cast %236 : vector<1x1x8x16xf32> to vector<8x16xf32>
    %238 = vector.shape_cast %235 : vector<8x16xf32> to vector<1x1x8x16xf32>
    tpu.vector_store %arg5[%c0_136, %c0_137, %c0_138, %c0_139], %238 {strides = array<i32>} : memref<1x8x8x16xf32, #tpu.memory_space<vmem>>, vector<1x1x8x16xf32>,
    %239 = vector.broadcast %43 : f32 to vector<8x16xf32>
    %240 = arith.mulf %110, %239 : vector<8x16xf32>
    %241 = vector.broadcast %44 : f32 to vector<8x16xf32>
    %242 = arith.mulf %148, %241 : vector<8x16xf32>
    %243 = arith.addf %240, %242 : vector<8x16xf32>
    %244 = vector.broadcast %45 : f32 to vector<8x16xf32>
    %245 = arith.mulf %186, %244 : vector<8x16xf32>
    %246 = arith.addf %243, %245 : vector<8x16xf32>
    %247 = vector.broadcast %46 : f32 to vector<8x16xf32>
    %248 = arith.mulf %224, %247 : vector<8x16xf32>
    %249 = arith.addf %246, %248 : vector<8x16xf32>
    %c0_140 = arith.constant 0 : index
    %c1_141 = arith.constant 1 : index
    %c0_142 = arith.constant 0 : index
    %c0_143 = arith.constant 0 : index
    %250 = vector.load %arg5[%c0_140, %c1_141, %c0_142, %c0_143] : memref<1x8x8x16xf32, #tpu.memory_space<vmem>>, vector<1x1x8x16xf32>
    %251 = vector.shape_cast %250 : vector<1x1x8x16xf32> to vector<8x16xf32>
    %252 = vector.shape_cast %249 : vector<8x16xf32> to vector<1x1x8x16xf32>
    tpu.vector_store %arg5[%c0_140, %c1_141, %c0_142, %c0_143], %252 {strides = array<i32>} : memref<1x8x8x16xf32, #tpu.memory_space<vmem>>, vector<1x1x8x16xf32>,
    %253 = vector.broadcast %47 : f32 to vector<8x16xf32>
    %254 = arith.mulf %110, %253 : vector<8x16xf32>
    %255 = vector.broadcast %48 : f32 to vector<8x16xf32>
    %256 = arith.mulf %148, %255 : vector<8x16xf32>
    %257 = arith.addf %254, %256 : vector<8x16xf32>
    %258 = vector.broadcast %49 : f32 to vector<8x16xf32>
    %259 = arith.mulf %186, %258 : vector<8x16xf32>
    %260 = arith.addf %257, %259 : vector<8x16xf32>
    %261 = vector.broadcast %50 : f32 to vector<8x16xf32>
    %262 = arith.mulf %224, %261 : vector<8x16xf32>
    %263 = arith.addf %260, %262 : vector<8x16xf32>
    %c0_144 = arith.constant 0 : index
    %c2_145 = arith.constant 2 : index
    %c0_146 = arith.constant 0 : index
    %c0_147 = arith.constant 0 : index
    %264 = vector.load %arg5[%c0_144, %c2_145, %c0_146, %c0_147] : memref<1x8x8x16xf32, #tpu.memory_space<vmem>>, vector<1x1x8x16xf32>
    %265 = vector.shape_cast %264 : vector<1x1x8x16xf32> to vector<8x16xf32>
    %266 = vector.shape_cast %263 : vector<8x16xf32> to vector<1x1x8x16xf32>
    tpu.vector_store %arg5[%c0_144, %c2_145, %c0_146, %c0_147], %266 {strides = array<i32>} : memref<1x8x8x16xf32, #tpu.memory_space<vmem>>, vector<1x1x8x16xf32>,
    %267 = vector.broadcast %51 : f32 to vector<8x16xf32>
    %268 = arith.mulf %110, %267 : vector<8x16xf32>
    %269 = vector.broadcast %52 : f32 to vector<8x16xf32>
    %270 = arith.mulf %148, %269 : vector<8x16xf32>
    %271 = arith.addf %268, %270 : vector<8x16xf32>
    %272 = vector.broadcast %53 : f32 to vector<8x16xf32>
    %273 = arith.mulf %186, %272 : vector<8x16xf32>
    %274 = arith.addf %271, %273 : vector<8x16xf32>
    %275 = vector.broadcast %54 : f32 to vector<8x16xf32>
    %276 = arith.mulf %224, %275 : vector<8x16xf32>
    %277 = arith.addf %274, %276 : vector<8x16xf32>
    %c0_148 = arith.constant 0 : index
    %c3_149 = arith.constant 3 : index
    %c0_150 = arith.constant 0 : index
    %c0_151 = arith.constant 0 : index
    %278 = vector.load %arg5[%c0_148, %c3_149, %c0_150, %c0_151] : memref<1x8x8x16xf32, #tpu.memory_space<vmem>>, vector<1x1x8x16xf32>
    %279 = vector.shape_cast %278 : vector<1x1x8x16xf32> to vector<8x16xf32>
    %280 = vector.shape_cast %277 : vector<8x16xf32> to vector<1x1x8x16xf32>
    tpu.vector_store %arg5[%c0_148, %c3_149, %c0_150, %c0_151], %280 {strides = array<i32>} : memref<1x8x8x16xf32, #tpu.memory_space<vmem>>, vector<1x1x8x16xf32>,
    %281 = vector.broadcast %55 : f32 to vector<8x16xf32>
    %282 = arith.mulf %110, %281 : vector<8x16xf32>
    %283 = vector.broadcast %56 : f32 to vector<8x16xf32>
    %284 = arith.mulf %148, %283 : vector<8x16xf32>
    %285 = arith.addf %282, %284 : vector<8x16xf32>
    %286 = vector.broadcast %57 : f32 to vector<8x16xf32>
    %287 = arith.mulf %186, %286 : vector<8x16xf32>
    %288 = arith.addf %285, %287 : vector<8x16xf32>
    %289 = vector.broadcast %58 : f32 to vector<8x16xf32>
    %290 = arith.mulf %224, %289 : vector<8x16xf32>
    %291 = arith.addf %288, %290 : vector<8x16xf32>
    %c0_152 = arith.constant 0 : index
    %c4_153 = arith.constant 4 : index
    %c0_154 = arith.constant 0 : index
    %c0_155 = arith.constant 0 : index
    %292 = vector.load %arg5[%c0_152, %c4_153, %c0_154, %c0_155] : memref<1x8x8x16xf32, #tpu.memory_space<vmem>>, vector<1x1x8x16xf32>
    %293 = vector.shape_cast %292 : vector<1x1x8x16xf32> to vector<8x16xf32>
    %294 = vector.shape_cast %291 : vector<8x16xf32> to vector<1x1x8x16xf32>
    tpu.vector_store %arg5[%c0_152, %c4_153, %c0_154, %c0_155], %294 {strides = array<i32>} : memref<1x8x8x16xf32, #tpu.memory_space<vmem>>, vector<1x1x8x16xf32>,
    %295 = vector.broadcast %59 : f32 to vector<8x16xf32>
    %296 = arith.mulf %110, %295 : vector<8x16xf32>
    %297 = vector.broadcast %60 : f32 to vector<8x16xf32>
    %298 = arith.mulf %148, %297 : vector<8x16xf32>
    %299 = arith.addf %296, %298 : vector<8x16xf32>
    %300 = vector.broadcast %61 : f32 to vector<8x16xf32>
    %301 = arith.mulf %186, %300 : vector<8x16xf32>
    %302 = arith.addf %299, %301 : vector<8x16xf32>
    %303 = vector.broadcast %62 : f32 to vector<8x16xf32>
    %304 = arith.mulf %224, %303 : vector<8x16xf32>
    %305 = arith.addf %302, %304 : vector<8x16xf32>
    %c0_156 = arith.constant 0 : index
    %c5_157 = arith.constant 5 : index
    %c0_158 = arith.constant 0 : index
    %c0_159 = arith.constant 0 : index
    %306 = vector.load %arg5[%c0_156, %c5_157, %c0_158, %c0_159] : memref<1x8x8x16xf32, #tpu.memory_space<vmem>>, vector<1x1x8x16xf32>
    %307 = vector.shape_cast %306 : vector<1x1x8x16xf32> to vector<8x16xf32>
    %308 = vector.shape_cast %305 : vector<8x16xf32> to vector<1x1x8x16xf32>
    tpu.vector_store %arg5[%c0_156, %c5_157, %c0_158, %c0_159], %308 {strides = array<i32>} : memref<1x8x8x16xf32, #tpu.memory_space<vmem>>, vector<1x1x8x16xf32>,
    %309 = vector.broadcast %63 : f32 to vector<8x16xf32>
    %310 = arith.mulf %110, %309 : vector<8x16xf32>
    %311 = vector.broadcast %64 : f32 to vector<8x16xf32>
    %312 = arith.mulf %148, %311 : vector<8x16xf32>
    %313 = arith.addf %310, %312 : vector<8x16xf32>
    %314 = vector.broadcast %65 : f32 to vector<8x16xf32>
    %315 = arith.mulf %186, %314 : vector<8x16xf32>
    %316 = arith.addf %313, %315 : vector<8x16xf32>
    %317 = vector.broadcast %66 : f32 to vector<8x16xf32>
    %318 = arith.mulf %224, %317 : vector<8x16xf32>
    %319 = arith.addf %316, %318 : vector<8x16xf32>
    %c0_160 = arith.constant 0 : index
    %c6_161 = arith.constant 6 : index
    %c0_162 = arith.constant 0 : index
    %c0_163 = arith.constant 0 : index
    %320 = vector.load %arg5[%c0_160, %c6_161, %c0_162, %c0_163] : memref<1x8x8x16xf32, #tpu.memory_space<vmem>>, vector<1x1x8x16xf32>
    %321 = vector.shape_cast %320 : vector<1x1x8x16xf32> to vector<8x16xf32>
    %322 = vector.shape_cast %319 : vector<8x16xf32> to vector<1x1x8x16xf32>
    tpu.vector_store %arg5[%c0_160, %c6_161, %c0_162, %c0_163], %322 {strides = array<i32>} : memref<1x8x8x16xf32, #tpu.memory_space<vmem>>, vector<1x1x8x16xf32>,
    %323 = vector.broadcast %67 : f32 to vector<8x16xf32>
    %324 = arith.mulf %110, %323 : vector<8x16xf32>
    %325 = vector.broadcast %68 : f32 to vector<8x16xf32>
    %326 = arith.mulf %148, %325 : vector<8x16xf32>
    %327 = arith.addf %324, %326 : vector<8x16xf32>
    %328 = vector.broadcast %69 : f32 to vector<8x16xf32>
    %329 = arith.mulf %186, %328 : vector<8x16xf32>
    %330 = arith.addf %327, %329 : vector<8x16xf32>
    %331 = vector.broadcast %70 : f32 to vector<8x16xf32>
    %332 = arith.mulf %224, %331 : vector<8x16xf32>
    %333 = arith.addf %330, %332 : vector<8x16xf32>
    %c0_164 = arith.constant 0 : index
    %c7_165 = arith.constant 7 : index
    %c0_166 = arith.constant 0 : index
    %c0_167 = arith.constant 0 : index
    %334 = vector.load %arg5[%c0_164, %c7_165, %c0_166, %c0_167] : memref<1x8x8x16xf32, #tpu.memory_space<vmem>>, vector<1x1x8x16xf32>
    %335 = vector.shape_cast %334 : vector<1x1x8x16xf32> to vector<8x16xf32>
    %336 = vector.shape_cast %333 : vector<8x16xf32> to vector<1x1x8x16xf32>
    tpu.vector_store %arg5[%c0_164, %c7_165, %c0_166, %c0_167], %336 {strides = array<i32>} : memref<1x8x8x16xf32, #tpu.memory_space<vmem>>, vector<1x1x8x16xf32>,
    return
  }
  func.func @transform_0(%arg0: i32, %arg1: i32) -> (i32, i32, i32, i32) {
    %c0_i32 = arith.constant 0 : i32
    %c0_i32_0 = arith.constant 0 : i32
    %c0_i32_1 = arith.constant 0 : i32
    %c0_i32_2 = arith.constant 0 : i32
    return %arg0, %c0_i32, %c0_i32_0, %c0_i32_1 : i32, i32, i32, i32
  }
  func.func @transform_1(%arg0: i32, %arg1: i32) -> (i32, i32) {
    %c0_i32 = arith.constant 0 : i32
    %c0_i32_0 = arith.constant 0 : i32
    %c0_i32_1 = arith.constant 0 : i32
    return %c0_i32, %c0_i32_0 : i32, i32
  }
  func.func @transform_2(%arg0: i32, %arg1: i32) -> (i32, i32) {
    %c0_i32 = arith.constant 0 : i32
    %c0_i32_0 = arith.constant 0 : i32
    %c0_i32_1 = arith.constant 0 : i32
    return %c0_i32, %c0_i32_0 : i32, i32
  }
  func.func @transform_3(%arg0: i32, %arg1: i32) -> (i32, i32, i32, i32) {
    %c0_i32 = arith.constant 0 : i32
    %c0_i32_0 = arith.constant 0 : i32
    %c0_i32_1 = arith.constant 0 : i32
    return %arg0, %c0_i32, %arg1, %c0_i32_0 : i32, i32, i32, i32
  }
}

</mosaic_0001>

<llo_original>
// kernel: tpu_custom_call.1
$region0: #{tpu_custom_call.1}
  #allocation0 [shape = 'u32[]', space=smem, size = 0x4, offset = 0x4, fixed_abs, tag = 'smem constant byte address 0x4 - core index']
  #allocation1 [shape = 'u32[72,128]{1,0:T(1,128)}', space=vmem, size = 0x9000, scoped, tag = 'internal scratch']
  #allocation2 [shape = 'f32[4,18,18]{2,1,0:T(8,128)}', space=vmem, size = 0xc000, scoped, tag = 'scratch operand']
  %s0 = inlined_call_operand.hbm [shape: f32[2,4,16,16], index: 0, kind: input, shape index: {}]
  %s1 = inlined_call_operand.vmem [shape: f32[4,9], index: 1, kind: input, shape index: {}]
  %s2 = inlined_call_operand.vmem [shape: f32[8,4], index: 2, kind: input, shape index: {}]
  %s3 = inlined_call_operand.hbm [shape: f32[2,8,16,16], index: 3, kind: output, shape index: {}]
  %s4 = sld [smem:[#allocation0]]
  $region61: #{tpu_custom_call.1} parent=0
    _
  %s6 = ssub.s32 1, %s4
  %s7 = scalar_select 0, %s6, %s4
  $region1: #{tpu_custom_call.1} parent=0
    #allocation3 [shape = 'u8[65536]{0}', space=vmem, size = 0x10000, scoped, tag = 'input window, operand 0']
    #allocation4 [shape = 's32[2]{0}', space=sflag, size = 0x8, scoped, tag = 'scoped memory for tpu_custom_call.1']
    #allocation5 [shape = 's32[2]{0}', space=sflag, size = 0x8, scoped, tag = 'scoped memory for tpu_custom_call.1']
    #allocation6 [shape = 's32[2]{0}', space=sflag, size = 0x8, scoped, tag = 'scoped memory for tpu_custom_call.1']
    #allocation7 [shape = 'u8[2048]{0}', space=smem, size = 0x800, scoped, tag = 'input window, operand 1, single buffered']
    #allocation8 [shape = 'u8[4096]{0}', space=smem, size = 0x1000, scoped, tag = 'input window, operand 2, single buffered']
    #allocation9 [shape = 's32[1]{0}', space=sflag, size = 0x4, scoped, tag = 'scoped memory for tpu_custom_call.1']
    #allocation10 [shape = 'u8[65536]{0}', space=vmem, size = 0x10000, scoped, tag = 'output window, operand 0']
    %8 = vsyncpa [#allocation4], 0
    %s9 = scalar_lea.sflag [#allocation4], 1
    %10 = vsyncpa %s9, 0
    %11 = vsyncpa [#allocation6], 0
    %12 = vsyncpa [#allocation9], 0
    %13 = vsyncpa [#allocation5], 0
    %s14 = scalar_lea.sflag [#allocation5], 1
    %15 = vsyncpa %s14, 0
    loop: start=0, step=1, limit=6
    $region2: #{tpu_custom_call.1} parent=1 // loop_pre_header
      _
    $region3: #{tpu_custom_call.1} parent=1 // loop_header
      %s17 = sphi 0, %s21
      %p18 = scmp.ge.s32.totalorder %s17, 6
      %s24 = sphi 0, %s36
      %s25 = sphi 0, %s32
      %s26 = sphi 0, %s24
      %s27 = sphi 0, %s25
      %s28 = sphi 0, %s26
      %s29 = sphi 0, %s27
      %s39 = sphi 0, %s41
      %s42 = sphi 0, %s39
      %s43 = sphi 0, %s42
      %s59 = sphi 0, %s43
      %s63 = sphi 0, %s63
      %s65 = sphi 0, %s63
      %s66 = sphi 0, %s65
      %s80 = sphi 0, %s66
      %s84 = sphi 0, %s84
      %s86 = sphi 0, %s84
      %s87 = sphi 0, %s86
      %s101 = sphi 0, %s87
      %s109 = sphi 0, %s111
      %s112 = sphi 0, %s109
      %s113 = sphi 0, %s112
      %s129 = sphi 0, %s113
    $region4: #{tpu_custom_call.1} parent=1 // loop_header_branch
      %20 = sbr.rel (%p18) target = $region8
    $region5: #{tpu_custom_call.1} parent=1 // loop_body
      %s22 = ssub.s32 %s17, 1
      %s23 = ssub.s32 %s17, 2
      %s30 = sadd.s32 1, %s25
      %p31 = scmp.ge.s32.totalorder %s30, 2
      %s32 = scalar_select %p31, 0, %s30
      %s33 = sadd.s32 1, %s24
      %s34 = scalar_select %p31, %s33, %s24
      %p35 = scmp.ge.s32.totalorder %s34, 2
      %s36 = scalar_select %p35, 0, %s34
      %s37 = ssub.s32 %s24, %s36
      %p38 = scmp.eq.s32.totalorder %s37, 0
      %s40 = sadd.s32 %s39, 1
      %s41 = scalar_select %p38, %s39, %s40
      %p44 = pneg %p38
      %p45 = scmp.eq.s32.totalorder %s17, 3
      %p46 = por %p44, %p45
      %p47 = scmp.ne.s32.totalorder %s39, %s42
      %p48 = scmp.eq.s32.totalorder %s17, 0
      %p49 = por %p47, %p48
      %p50 = scmp.ne.s32.totalorder %s39, %s42
      %p51 = scmp.eq.s32.totalorder %s22, 3
      %p52 = por %p50, %p51
      %p53 = scmp.ne.s32.totalorder %s42, %s43
      %p54 = scmp.eq.s32.totalorder %s22, 0
      %p55 = por %p53, %p54
      %p56 = scmp.ne.s32.totalorder %s42, %s43
      %p57 = scmp.eq.s32.totalorder %s23, 3
      %p58 = por %p56, %p57
      %p60 = scmp.ne.s32.totalorder %s43, %s59
      %p61 = scmp.eq.s32.totalorder %s23, 0
      %p62 = por %p60, %p61
      %s64 = sadd.s32 %s63, 1
      %p67 = scmp.eq.s32.totalorder %s17, 3
      %p68 = scmp.ne.s32.totalorder %s63, %s65
      %p69 = scmp.eq.s32.totalorder %s17, 0
      %p70 = por %p68, %p69
      %p71 = scmp.ne.s32.totalorder %s63, %s65
      %p72 = scmp.eq.s32.totalorder %s22, 3
      %p73 = por %p71, %p72
      %p74 = scmp.ne.s32.totalorder %s65, %s66
      %p75 = scmp.eq.s32.totalorder %s22, 0
      %p76 = por %p74, %p75
      %p77 = scmp.ne.s32.totalorder %s65, %s66
      %p78 = scmp.eq.s32.totalorder %s23, 3
      %p79 = por %p77, %p78
      %p81 = scmp.ne.s32.totalorder %s66, %s80
      %p82 = scmp.eq.s32.totalorder %s23, 0
      %p83 = por %p81, %p82
      %s85 = sadd.s32 %s84, 1
      %p88 = scmp.eq.s32.totalorder %s17, 3
      %p89 = scmp.ne.s32.totalorder %s84, %s86
      %p90 = scmp.eq.s32.totalorder %s17, 0
      %p91 = por %p89, %p90
      %p92 = scmp.ne.s32.totalorder %s84, %s86
      %p93 = scmp.eq.s32.totalorder %s22, 3
      %p94 = por %p92, %p93
      %p95 = scmp.ne.s32.totalorder %s86, %s87
      %p96 = scmp.eq.s32.totalorder %s22, 0
      %p97 = por %p95, %p96
      %p98 = scmp.ne.s32.totalorder %s86, %s87
      %p99 = scmp.eq.s32.totalorder %s23, 3
      %p100 = por %p98, %p99
      %p102 = scmp.ne.s32.totalorder %s87, %s101
      %p103 = scmp.eq.s32.totalorder %s23, 0
      %p104 = por %p102, %p103
      %s105 = ssub.s32 %s24, %s36
      %s106 = ssub.s32 %s25, %s32
      %s107 = sor.u32 %s105, %s106
      %p108 = scmp.eq.s32.totalorder %s107, 0
      %s110 = sadd.s32 %s109, 1
      %s111 = scalar_select %p108, %s109, %s110
      %p114 = pneg %p108
      %p115 = scmp.eq.s32.totalorder %s17, 3
      %p116 = por %p114, %p115
      %p117 = scmp.ne.s32.totalorder %s109, %s112
      %p118 = scmp.eq.s32.totalorder %s17, 0
      %p119 = por %p117, %p118
      %p120 = scmp.ne.s32.totalorder %s109, %s112
      %p121 = scmp.eq.s32.totalorder %s22, 3
      %p122 = por %p120, %p121
      %p123 = scmp.ne.s32.totalorder %s112, %s113
      %p124 = scmp.eq.s32.totalorder %s22, 0
      %p125 = por %p123, %p124
      %p126 = scmp.ne.s32.totalorder %s112, %s113
      %p127 = scmp.eq.s32.totalorder %s23, 3
      %p128 = por %p126, %p127
      %p130 = scmp.ne.s32.totalorder %s113, %s129
      %p131 = scmp.eq.s32.totalorder %s23, 0
      %p132 = por %p130, %p131
      %p133 = scmp.le.s32.totalorder 1, %s17
      %p134 = scmp.lt.s32.totalorder %s17, 5
      %p135 = pnand %p133, %p134
      %p136 = pneg %p135
      // Predicated region
      $region9: #{tpu_custom_call.1} parent=5 // pred_check
        _
      $region10: #{tpu_custom_call.1} parent=5 // pred_check_branch
        %138 = sbr.rel (%p135) target = $region12
      $region11: #{tpu_custom_call.1} parent=5 // pred_region
        %s139 = ssub.s32 %s17, 1
        // Predicated region
        $region13: #{tpu_custom_call.1} parent=11 // pred_check
          %p140 = pneg %p76
        $region14: #{tpu_custom_call.1} parent=11 // pred_check_branch
          %142 = sbr.rel (%p140) target = $region16
        $region15: #{tpu_custom_call.1} parent=11 // pred_region
          %144 = vsyncadd [#allocation6], 0
          %s146 = sshll.u32 %s1, 4
          %s147 = int_to_ptr.vmem [resolvable:$true] %s146
          %149 = dma.vmem_to_smem %s147, 64, [#allocation7], [#allocation6]
        $region16: #{tpu_custom_call.1} parent=11 // pred_fallthru
          _
        // Predicated region
        $region17: #{tpu_custom_call.1} parent=11 // pred_check
          %p150 = pneg %p97
        $region18: #{tpu_custom_call.1} parent=11 // pred_check_branch
          %152 = sbr.rel (%p150) target = $region20
        $region19: #{tpu_custom_call.1} parent=11 // pred_region
          %154 = vsyncadd [#allocation9], 0
          %s156 = sshll.u32 %s2, 4
          %s157 = int_to_ptr.vmem [resolvable:$true] %s156
          %159 = dma.vmem_to_smem %s157, 128, [#allocation8], [#allocation9]
        $region20: #{tpu_custom_call.1} parent=11 // pred_fallthru
          _
      $region12: #{tpu_custom_call.1} parent=5 // pred_fallthru
        _
      %p160 = scmp.lt.s32.totalorder %s17, 4
      // Predicated region
      $region21: #{tpu_custom_call.1} parent=5 // pred_check
        %p161 = pneg %p160
      $region22: #{tpu_custom_call.1} parent=5 // pred_check_branch
        %163 = sbr.rel (%p161) target = $region24
      $region23: #{tpu_custom_call.1} parent=5 // pred_region
        // Predicated region
        $region25: #{tpu_custom_call.1} parent=23 // pred_check
          %p164 = pneg %p49
        $region26: #{tpu_custom_call.1} parent=23 // pred_check_branch
          %166 = sbr.rel (%p164) target = $region28
        $region27: #{tpu_custom_call.1} parent=23 // pred_region
          %s167 = sand.u32 %s39, 1
          %s168 = scalar_lea.sflag [#allocation4], %s167
          %s169 = sand.u32 %s39, 1
          %s170 = smul.addr %s169, 64
          %s171 = scalar_lea.vmem [#allocation3], %s170
          %173 = vsyncadd %s168, 0
          %s174 = smul.addr %s24, 8
          %s175 = smul.addr %s174, 8
          %s176 = scalar_lea.hbm %s0, %s175
          %s177 = sshll.u32 %s176, 4
          %s178 = int_to_ptr.hbm [resolvable:$true] %s177
          %s179 = sshll.u32 %s171, 4
          %s180 = int_to_ptr.vmem [resolvable:$true] %s179
          %185 = dma.hbm_to_vmem [thread:$0]  %s178, 1024, %s180, %s168, 128, 128, 8
        $region28: #{tpu_custom_call.1} parent=23 // pred_fallthru
          _
      $region24: #{tpu_custom_call.1} parent=5 // pred_fallthru
        _
      %p186 = scmp.le.s32.totalorder 1, %s17
      %p187 = scmp.lt.s32.totalorder %s17, 5
      %p188 = pnand %p186, %p187
      %p189 = pneg %p188
      // Predicated region
      $region29: #{tpu_custom_call.1} parent=5 // pred_check
        _
      $region30: #{tpu_custom_call.1} parent=5 // pred_check_branch
        %191 = sbr.rel (%p188) target = $region32
      $region31: #{tpu_custom_call.1} parent=5 // pred_region
        %s192 = ssub.s32 %s17, 1
        %s193 = sand.u32 %s42, 1
        %s194 = scalar_lea.sflag [#allocation4], %s193
        %s195 = sand.u32 %s42, 1
        %s196 = smul.addr %s195, 64
        %s197 = scalar_lea.vmem [#allocation3], %s196
        // Predicated region
        $region33: #{tpu_custom_call.1} parent=31 // pred_check
          %p198 = pneg %p55
        $region34: #{tpu_custom_call.1} parent=31 // pred_check_branch
          %200 = sbr.rel (%p198) target = $region36
        $region35: #{tpu_custom_call.1} parent=31 // pred_region
          %202 = dma.done %s194, 1024
        $region36: #{tpu_custom_call.1} parent=31 // pred_fallthru
          _
        // Predicated region
        $region37: #{tpu_custom_call.1} parent=31 // pred_check
          %p203 = pneg %p76
        $region38: #{tpu_custom_call.1} parent=31 // pred_check_branch
          %205 = sbr.rel (%p203) target = $region40
        $region39: #{tpu_custom_call.1} parent=31 // pred_region
          %207 = dma.done [#allocation6], 64
        $region40: #{tpu_custom_call.1} parent=31 // pred_fallthru
          _
        // Predicated region
        $region41: #{tpu_custom_call.1} parent=31 // pred_check
          %p208 = pneg %p97
        $region42: #{tpu_custom_call.1} parent=31 // pred_check_branch
          %210 = sbr.rel (%p208) target = $region44
        $region43: #{tpu_custom_call.1} parent=31 // pred_region
          %212 = dma.done [#allocation9], 128
        $region44: #{tpu_custom_call.1} parent=31 // pred_fallthru
          _
        %213 = sfence
        %s214 = sand.u32 %s42, 1
        %s215 = scalar_lea.sflag [#allocation4], %s214
        %s216 = sand.u32 %s42, 1
        %s217 = smul.addr %s216, 64
        %s218 = scalar_lea.vmem [#allocation3], %s217
        %p219 = pneg %p55
        %p220 = pneg %p52
        %p221 = pneg %p76
        %p222 = pneg %p73
        %p223 = pneg %p97
        %p224 = pneg %p94
        %p225 = pneg %p125
        %p226 = pneg %p122
        %s227 = sand.u32 %s112, 1
        %s228 = scalar_lea.sflag [#allocation5], %s227
        %s229 = sand.u32 %s112, 1
        %s230 = smul.addr %s229, 64
        %s231 = scalar_lea.vmem [#allocation10], %s230
        %p232 = scmp.eq.s32.totalorder %s27, 0
        // Predicated region
        $region45: #{tpu_custom_call.1} parent=31 // pred_check
          %p233 = pneg %p232
        $region46: #{tpu_custom_call.1} parent=31 // pred_check_branch
          %235 = sbr.rel (%p233) target = $region48
        $region47: #{tpu_custom_call.1} parent=31 // pred_region
          %vm236 = vcmask 146432
          %237 = vst.msk [vmem:[#allocation2] sm:$0xff] %vm236, 0.0
          %238 = vst.msk [vmem:[#allocation2 + $0x8] sm:$0xff] %vm236, 0.0
          %vm239 = vcmask 140288
          %240 = vst.msk [vmem:[#allocation2 + $0x10] sm:$0x3] %vm239, 0.0
          %241 = vst.msk [vmem:[#allocation2 + $0x18] sm:$0xff] %vm236, 0.0
          %242 = vst.msk [vmem:[#allocation2 + $0x20] sm:$0xff] %vm236, 0.0
          %243 = vst.msk [vmem:[#allocation2 + $0x28] sm:$0x3] %vm239, 0.0
          %244 = vst.msk [vmem:[#allocation2 + $0x30] sm:$0xff] %vm236, 0.0
          %245 = vst.msk [vmem:[#allocation2 + $0x38] sm:$0xff] %vm236, 0.0
          %246 = vst.msk [vmem:[#allocation2 + $0x40] sm:$0x3] %vm239, 0.0
          %247 = vst.msk [vmem:[#allocation2 + $0x48] sm:$0xff] %vm236, 0.0
          %248 = vst.msk [vmem:[#allocation2 + $0x50] sm:$0xff] %vm236, 0.0
          %249 = vst.msk [vmem:[#allocation2 + $0x58] sm:$0x3] %vm239, 0.0
          %v250 = vld [vmem:[%s197] sm:$0xff]
          %v251 = vld [vmem:[%s197 + $0x8] sm:$0xff]
          %254 = vrot.lane.b32.xlu0 %v250, 1
          %v255 = vpop.permute.xlu0 %254
          %256 = vrot.lane.b32.xlu0 %v251, 1
          %v257 = vpop.permute.xlu0 %256
          %vm260 = vcmask 138248
          %261 = vst.msk [vmem:[#allocation2 + $0x1] sm:$0xff] %vm260, %v255
          %262 = vst.msk [vmem:[#allocation2 + $0x9] sm:$0xff] %vm260, %v257
          %s263 = scalar_lea.vmem %s197, 16 [#allocation3]
          %v264 = vld [vmem:[%s263] sm:$0xff]
          %v265 = vld [vmem:[%s263 + $0x8] sm:$0xff]
          %268 = vrot.lane.b32.xlu0 %v264, 1
          %v269 = vpop.permute.xlu0 %268
          %270 = vrot.lane.b32.xlu0 %v265, 1
          %v271 = vpop.permute.xlu0 %270
          %s274 = scalar_lea.vmem [#allocation2], 24
          %275 = vst.msk [vmem:[%s274 + $0x1] sm:$0xff] %vm260, %v269
          %276 = vst.msk [vmem:[%s274 + $0x9] sm:$0xff] %vm260, %v271
          %s277 = scalar_lea.vmem %s197, 32 [#allocation3]
          %v278 = vld [vmem:[%s277] sm:$0xff]
          %v279 = vld [vmem:[%s277 + $0x8] sm:$0xff]
          %282 = vrot.lane.b32.xlu0 %v278, 1
          %v283 = vpop.permute.xlu0 %282
          %284 = vrot.lane.b32.xlu0 %v279, 1
          %v285 = vpop.permute.xlu0 %284
          %s288 = scalar_lea.vmem [#allocation2], 48
          %289 = vst.msk [vmem:[%s288 + $0x1] sm:$0xff] %vm260, %v283
          %290 = vst.msk [vmem:[%s288 + $0x9] sm:$0xff] %vm260, %v285
          %s291 = scalar_lea.vmem %s197, 48 [#allocation3]
          %v292 = vld [vmem:[%s291] sm:$0xff]
          %v293 = vld [vmem:[%s291 + $0x8] sm:$0xff]
          %296 = vrot.lane.b32.xlu0 %v292, 1
          %v297 = vpop.permute.xlu0 %296
          %298 = vrot.lane.b32.xlu0 %v293, 1
          %v299 = vpop.permute.xlu0 %298
          %s302 = scalar_lea.vmem [#allocation2], 72
          %303 = vst.msk [vmem:[%s302 + $0x1] sm:$0xff] %vm260, %v297
          %304 = vst.msk [vmem:[%s302 + $0x9] sm:$0xff] %vm260, %v299
        $region48: #{tpu_custom_call.1} parent=31 // pred_fallthru
          _
        %s305 = sld [smem:[#allocation7]]
        %s306 = sld [smem:[#allocation7 + $0x1]]
        %s307 = sld [smem:[#allocation7 + $0x2]]
        %s308 = sld [smem:[#allocation7 + $0x3]]
        %s309 = sld [smem:[#allocation7 + $0x4]]
        %s310 = sld [smem:[#allocation7 + $0x5]]
        %s311 = sld [smem:[#allocation7 + $0x6]]
        %s312 = sld [smem:[#allocation7 + $0x7]]
        %s313 = sld [smem:[#allocation7 + $0x8]]
        %s314 = sld [smem:[#allocation7 + $0x80]]
        %s315 = sld [smem:[#allocation7 + $0x81]]
        %s316 = sld [smem:[#allocation7 + $0x82]]
        %s317 = sld [smem:[#allocation7 + $0x83]]
        %s318 = sld [smem:[#allocation7 + $0x84]]
        %s319 = sld [smem:[#allocation7 + $0x85]]
        %s320 = sld [smem:[#allocation7 + $0x86]]
        %s321 = sld [smem:[#allocation7 + $0x87]]
        %s322 = sld [smem:[#allocation7 + $0x88]]
        %s323 = sld [smem:[#allocation7 + $0x100]]
        %s324 = sld [smem:[#allocation7 + $0x101]]
        %s325 = sld [smem:[#allocation7 + $0x102]]
        %s326 = sld [smem:[#allocation7 + $0x103]]
        %s327 = sld [smem:[#allocation7 + $0x104]]
        %s328 = sld [smem:[#allocation7 + $0x105]]
        %s329 = sld [smem:[#allocation7 + $0x106]]
        %s330 = sld [smem:[#allocation7 + $0x107]]
        %s331 = sld [smem:[#allocation7 + $0x108]]
        %s332 = sld [smem:[#allocation7 + $0x180]]
        %s333 = sld [smem:[#allocation7 + $0x181]]
        %s334 = sld [smem:[#allocation7 + $0x182]]
        %s335 = sld [smem:[#allocation7 + $0x183]]
        %s336 = sld [smem:[#allocation7 + $0x184]]
        %s337 = sld [smem:[#allocation7 + $0x185]]
        %s338 = sld [smem:[#allocation7 + $0x186]]
        %s339 = sld [smem:[#allocation7 + $0x187]]
        %s340 = sld [smem:[#allocation7 + $0x188]]
        %s341 = sld [smem:[#allocation8]]
        %s342 = sld [smem:[#allocation8 + $0x1]]
        %s343 = sld [smem:[#allocation8 + $0x2]]
        %s344 = sld [smem:[#allocation8 + $0x3]]
        %s345 = sld [smem:[#allocation8 + $0x80]]
        %s346 = sld [smem:[#allocation8 + $0x81]]
        %s347 = sld [smem:[#allocation8 + $0x82]]
        %s348 = sld [smem:[#allocation8 + $0x83]]
        %s349 = sld [smem:[#allocation8 + $0x100]]
        %s350 = sld [smem:[#allocation8 + $0x101]]
        %s351 = sld [smem:[#allocation8 + $0x102]]
        %s352 = sld [smem:[#allocation8 + $0x103]]
        %s353 = sld [smem:[#allocation8 + $0x180]]
        %s354 = sld [smem:[#allocation8 + $0x181]]
        %s355 = sld [smem:[#allocation8 + $0x182]]
        %s356 = sld [smem:[#allocation8 + $0x183]]
        %s357 = sld [smem:[#allocation8 + $0x200]]
        %s358 = sld [smem:[#allocation8 + $0x201]]
        %s359 = sld [smem:[#allocation8 + $0x202]]
        %s360 = sld [smem:[#allocation8 + $0x203]]
        %s361 = sld [smem:[#allocation8 + $0x280]]
        %s362 = sld [smem:[#allocation8 + $0x281]]
        %s363 = sld [smem:[#allocation8 + $0x282]]
        %s364 = sld [smem:[#allocation8 + $0x283]]
        %s365 = sld [smem:[#allocation8 + $0x300]]
        %s366 = sld [smem:[#allocation8 + $0x301]]
        %s367 = sld [smem:[#allocation8 + $0x302]]
        %s368 = sld [smem:[#allocation8 + $0x303]]
        %s369 = sld [smem:[#allocation8 + $0x380]]
        %s370 = sld [smem:[#allocation8 + $0x381]]
        %s371 = sld [smem:[#allocation8 + $0x382]]
        %s372 = sld [smem:[#allocation8 + $0x383]]
        %s373 = smul.u32 %s27, 8
        %s374 = scalar_lea.vmem [#allocation2], %s373
        %v375 = vld [vmem:[%s374] sm:$0xff]
        %v376 = vld [vmem:[%s374 + $0x8] sm:$0x3]
        %v377 = vstv %s305
        %v378 = vmul.f32 %v375, %v377
        %v379 = vstv %s306
        %v380 = vmul.f32 %v375, %v379
        %382 = vrot.lane.b32.xlu0 %v380, 127
        %v383 = vpop.permute.xlu0 %382
        %v385 = vadd.f32 %v378, %v383
        %v386 = vstv %s307
        %v387 = vmul.f32 %v375, %v386
        %389 = vrot.lane.b32.xlu0 %v387, 126
        %v390 = vpop.permute.xlu0 %389
        %v392 = vadd.f32 %v385, %v390
        %v393 = vstv %s308
        %v394 = vmul.f32 %v375, %v393
        %v395 = vmul.f32 %v376, %v393
        %vm398 = vcmask 1046528
        %v399 = vrot.slane %v394, 1
        %v400 = vrot.slane %v395, 1
        %v401 = vsel %vm398, %v399, %v400
        %v403 = vadd.f32 %v392, %v401
        %v404 = vstv %s309
        %v405 = vmul.f32 %v375, %v404
        %v406 = vmul.f32 %v376, %v404
        %v409 = vrot.slane %v405, 1
        %v410 = vrot.slane %v406, 1
        %v411 = vsel %vm398, %v409, %v410
        %412 = vrot.lane.b32.xlu0 %v411, 127
        %v413 = vpop.permute.xlu0 %412
        %v415 = vadd.f32 %v403, %v413
        %v416 = vstv %s310
        %v417 = vmul.f32 %v375, %v416
        %v418 = vmul.f32 %v376, %v416
        %v421 = vrot.slane %v417, 1
        %v422 = vrot.slane %v418, 1
        %v423 = vsel %vm398, %v421, %v422
        %424 = vrot.lane.b32.xlu0 %v423, 126
        %v425 = vpop.permute.xlu0 %424
        %v427 = vadd.f32 %v415, %v425
        %v428 = vstv %s311
        %v429 = vmul.f32 %v375, %v428
        %v430 = vmul.f32 %v376, %v428
        %vm433 = vcmask 1045504
        %v434 = vrot.slane %v429, 2
        %v435 = vrot.slane %v430, 2
        %v436 = vsel %vm433, %v434, %v435
        %v438 = vadd.f32 %v427, %v436
        %v439 = vstv %s312
        %v440 = vmul.f32 %v375, %v439
        %v441 = vmul.f32 %v376, %v439
        %v444 = vrot.slane %v440, 2
        %v445 = vrot.slane %v441, 2
        %v446 = vsel %vm433, %v444, %v445
        %447 = vrot.lane.b32.xlu0 %v446, 127
        %v448 = vpop.permute.xlu0 %447
        %v450 = vadd.f32 %v438, %v448
        %v451 = vstv %s313
        %v452 = vmul.f32 %v375, %v451
        %v453 = vmul.f32 %v376, %v451
        %v456 = vrot.slane %v452, 2
        %v457 = vrot.slane %v453, 2
        %v458 = vsel %vm433, %v456, %v457
        %459 = vrot.lane.b32.xlu0 %v458, 126
        %v460 = vpop.permute.xlu0 %459
        %v462 = vadd.f32 %v450, %v460
        %s463 = sadd.s32 %s373, 24
        %s464 = scalar_lea.vmem [#allocation2], %s463
        %v465 = vld [vmem:[%s464] sm:$0xff]
        %v466 = vld [vmem:[%s464 + $0x8] sm:$0x3]
        %v467 = vstv %s314
        %v468 = vmul.f32 %v465, %v467
        %v469 = vstv %s315
        %v470 = vmul.f32 %v465, %v469
        %472 = vrot.lane.b32.xlu0 %v470, 127
        %v473 = vpop.permute.xlu0 %472
        %v475 = vadd.f32 %v468, %v473
        %v476 = vstv %s316
        %v477 = vmul.f32 %v465, %v476
        %479 = vrot.lane.b32.xlu0 %v477, 126
        %v480 = vpop.permute.xlu0 %479
        %v482 = vadd.f32 %v475, %v480
        %v483 = vstv %s317
        %v484 = vmul.f32 %v465, %v483
        %v485 = vmul.f32 %v466, %v483
        %v488 = vrot.slane %v484, 1
        %v489 = vrot.slane %v485, 1
        %v490 = vsel %vm398, %v488, %v489
        %v492 = vadd.f32 %v482, %v490
        %v493 = vstv %s318
        %v494 = vmul.f32 %v465, %v493
        %v495 = vmul.f32 %v466, %v493
        %v498 = vrot.slane %v494, 1
        %v499 = vrot.slane %v495, 1
        %v500 = vsel %vm398, %v498, %v499
        %501 = vrot.lane.b32.xlu0 %v500, 127
        %v502 = vpop.permute.xlu0 %501
        %v504 = vadd.f32 %v492, %v502
        %v505 = vstv %s319
        %v506 = vmul.f32 %v465, %v505
        %v507 = vmul.f32 %v466, %v505
        %v510 = vrot.slane %v506, 1
        %v511 = vrot.slane %v507, 1
        %v512 = vsel %vm398, %v510, %v511
        %513 = vrot.lane.b32.xlu0 %v512, 126
        %v514 = vpop.permute.xlu0 %513
        %v516 = vadd.f32 %v504, %v514
        %v517 = vstv %s320
        %v518 = vmul.f32 %v465, %v517
        %v519 = vmul.f32 %v466, %v517
        %v522 = vrot.slane %v518, 2
        %v523 = vrot.slane %v519, 2
        %v524 = vsel %vm433, %v522, %v523
        %v526 = vadd.f32 %v516, %v524
        %v527 = vstv %s321
        %v528 = vmul.f32 %v465, %v527
        %v529 = vmul.f32 %v466, %v527
        %v532 = vrot.slane %v528, 2
        %v533 = vrot.slane %v529, 2
        %v534 = vsel %vm433, %v532, %v533
        %535 = vrot.lane.b32.xlu0 %v534, 127
        %v536 = vpop.permute.xlu0 %535
        %v538 = vadd.f32 %v526, %v536
        %v539 = vstv %s322
        %v540 = vmul.f32 %v465, %v539
        %v541 = vmul.f32 %v466, %v539
        %v544 = vrot.slane %v540, 2
        %v545 = vrot.slane %v541, 2
        %v546 = vsel %vm433, %v544, %v545
        %547 = vrot.lane.b32.xlu0 %v546, 126
        %v548 = vpop.permute.xlu0 %547
        %v550 = vadd.f32 %v538, %v548
        %s551 = sadd.s32 %s373, 48
        %s552 = scalar_lea.vmem [#allocation2], %s551
        %v553 = vld [vmem:[%s552] sm:$0xff]
        %v554 = vld [vmem:[%s552 + $0x8] sm:$0x3]
        %v555 = vstv %s323
        %v556 = vmul.f32 %v553, %v555
        %v557 = vstv %s324
        %v558 = vmul.f32 %v553, %v557
        %560 = vrot.lane.b32.xlu0 %v558, 127
        %v561 = vpop.permute.xlu0 %560
        %v563 = vadd.f32 %v556, %v561
        %v564 = vstv %s325
        %v565 = vmul.f32 %v553, %v564
        %567 = vrot.lane.b32.xlu0 %v565, 126
        %v568 = vpop.permute.xlu0 %567
        %v570 = vadd.f32 %v563, %v568
        %v571 = vstv %s326
        %v572 = vmul.f32 %v553, %v571
        %v573 = vmul.f32 %v554, %v571
        %v576 = vrot.slane %v572, 1
        %v577 = vrot.slane %v573, 1
        %v578 = vsel %vm398, %v576, %v577
        %v580 = vadd.f32 %v570, %v578
        %v581 = vstv %s327
        %v582 = vmul.f32 %v553, %v581
        %v583 = vmul.f32 %v554, %v581
        %v586 = vrot.slane %v582, 1
        %v587 = vrot.slane %v583, 1
        %v588 = vsel %vm398, %v586, %v587
        %589 = vrot.lane.b32.xlu0 %v588, 127
        %v590 = vpop.permute.xlu0 %589
        %v592 = vadd.f32 %v580, %v590
        %v593 = vstv %s328
        %v594 = vmul.f32 %v553, %v593
        %v595 = vmul.f32 %v554, %v593
        %v598 = vrot.slane %v594, 1
        %v599 = vrot.slane %v595, 1
        %v600 = vsel %vm398, %v598, %v599
        %601 = vrot.lane.b32.xlu0 %v600, 126
        %v602 = vpop.permute.xlu0 %601
        %v604 = vadd.f32 %v592, %v602
        %v605 = vstv %s329
        %v606 = vmul.f32 %v553, %v605
        %v607 = vmul.f32 %v554, %v605
        %v610 = vrot.slane %v606, 2
        %v611 = vrot.slane %v607, 2
        %v612 = vsel %vm433, %v610, %v611
        %v614 = vadd.f32 %v604, %v612
        %v615 = vstv %s330
        %v616 = vmul.f32 %v553, %v615
        %v617 = vmul.f32 %v554, %v615
        %v620 = vrot.slane %v616, 2
        %v621 = vrot.slane %v617, 2
        %v622 = vsel %vm433, %v620, %v621
        %623 = vrot.lane.b32.xlu0 %v622, 127
        %v624 = vpop.permute.xlu0 %623
        %v626 = vadd.f32 %v614, %v624
        %v627 = vstv %s331
        %v628 = vmul.f32 %v553, %v627
        %v629 = vmul.f32 %v554, %v627
        %v632 = vrot.slane %v628, 2
        %v633 = vrot.slane %v629, 2
        %v634 = vsel %vm433, %v632, %v633
        %635 = vrot.lane.b32.xlu0 %v634, 126
        %v636 = vpop.permute.xlu0 %635
        %v638 = vadd.f32 %v626, %v636
        %s639 = sadd.s32 %s373, 72
        %s640 = scalar_lea.vmem [#allocation2], %s639
        %v641 = vld [vmem:[%s640] sm:$0xff]
        %v642 = vld [vmem:[%s640 + $0x8] sm:$0x3]
        %v643 = vstv %s332
        %v644 = vmul.f32 %v641, %v643
        %v645 = vstv %s333
        %v646 = vmul.f32 %v641, %v645
        %648 = vrot.lane.b32.xlu0 %v646, 127
        %v649 = vpop.permute.xlu0 %648
        %v651 = vadd.f32 %v644, %v649
        %v652 = vstv %s334
        %v653 = vmul.f32 %v641, %v652
        %655 = vrot.lane.b32.xlu0 %v653, 126
        %v656 = vpop.permute.xlu0 %655
        %v658 = vadd.f32 %v651, %v656
        %v659 = vstv %s335
        %v660 = vmul.f32 %v641, %v659
        %v661 = vmul.f32 %v642, %v659
        %v664 = vrot.slane %v660, 1
        %v665 = vrot.slane %v661, 1
        %v666 = vsel %vm398, %v664, %v665
        %v668 = vadd.f32 %v658, %v666
        %v669 = vstv %s336
        %v670 = vmul.f32 %v641, %v669
        %v671 = vmul.f32 %v642, %v669
        %v674 = vrot.slane %v670, 1
        %v675 = vrot.slane %v671, 1
        %v676 = vsel %vm398, %v674, %v675
        %677 = vrot.lane.b32.xlu0 %v676, 127
        %v678 = vpop.permute.xlu0 %677
        %v680 = vadd.f32 %v668, %v678
        %v681 = vstv %s337
        %v682 = vmul.f32 %v641, %v681
        %v683 = vmul.f32 %v642, %v681
        %v686 = vrot.slane %v682, 1
        %v687 = vrot.slane %v683, 1
        %v688 = vsel %vm398, %v686, %v687
        %689 = vrot.lane.b32.xlu0 %v688, 126
        %v690 = vpop.permute.xlu0 %689
        %v692 = vadd.f32 %v680, %v690
        %v693 = vstv %s338
        %v694 = vmul.f32 %v641, %v693
        %v695 = vmul.f32 %v642, %v693
        %v698 = vrot.slane %v694, 2
        %v699 = vrot.slane %v695, 2
        %v700 = vsel %vm433, %v698, %v699
        %v702 = vadd.f32 %v692, %v700
        %v703 = vstv %s339
        %v704 = vmul.f32 %v641, %v703
        %v705 = vmul.f32 %v642, %v703
        %v708 = vrot.slane %v704, 2
        %v709 = vrot.slane %v705, 2
        %v710 = vsel %vm433, %v708, %v709
        %711 = vrot.lane.b32.xlu0 %v710, 127
        %v712 = vpop.permute.xlu0 %711
        %v714 = vadd.f32 %v702, %v712
        %v715 = vstv %s340
        %v716 = vmul.f32 %v641, %v715
        %v717 = vmul.f32 %v642, %v715
        %v720 = vrot.slane %v716, 2
        %v721 = vrot.slane %v717, 2
        %v722 = vsel %vm433, %v720, %v721
        %723 = vrot.lane.b32.xlu0 %v722, 126
        %v724 = vpop.permute.xlu0 %723
        %v726 = vadd.f32 %v714, %v724
        %v727 = vstv %s341
        %v728 = vmul.f32 %v462, %v727
        %v729 = vstv %s342
        %v730 = vmul.f32 %v550, %v729
        %v731 = vadd.f32 %v728, %v730
        %v732 = vstv %s343
        %v733 = vmul.f32 %v638, %v732
        %v734 = vadd.f32 %v731, %v733
        %v735 = vstv %s344
        %v736 = vmul.f32 %v726, %v735
        %v737 = vadd.f32 %v734, %v736
        %vm738 = vcmask 130048
        %739 = vst.msk [vmem:[%s231] sm:$0xff] %vm738, %v737
        %v740 = vstv %s345
        %v741 = vmul.f32 %v462, %v740
        %v742 = vstv %s346
        %v743 = vmul.f32 %v550, %v742
        %v744 = vadd.f32 %v741, %v743
        %v745 = vstv %s347
        %v746 = vmul.f32 %v638, %v745
        %v747 = vadd.f32 %v744, %v746
        %v748 = vstv %s348
        %v749 = vmul.f32 %v726, %v748
        %v750 = vadd.f32 %v747, %v749
        %s751 = scalar_lea.vmem %s231, 8 [#allocation10]
        %752 = vst.msk [vmem:[%s751] sm:$0xff] %vm738, %v750
        %v753 = vstv %s349
        %v754 = vmul.f32 %v462, %v753
        %v755 = vstv %s350
        %v756 = vmul.f32 %v550, %v755
        %v757 = vadd.f32 %v754, %v756
        %v758 = vstv %s351
        %v759 = vmul.f32 %v638, %v758
        %v760 = vadd.f32 %v757, %v759
        %v761 = vstv %s352
        %v762 = vmul.f32 %v726, %v761
        %v763 = vadd.f32 %v760, %v762
        %s764 = scalar_lea.vmem %s231, 16 [#allocation10]
        %765 = vst.msk [vmem:[%s764] sm:$0xff] %vm738, %v763
        %v766 = vstv %s353
        %v767 = vmul.f32 %v462, %v766
        %v768 = vstv %s354
        %v769 = vmul.f32 %v550, %v768
        %v770 = vadd.f32 %v767, %v769
        %v771 = vstv %s355
        %v772 = vmul.f32 %v638, %v771
        %v773 = vadd.f32 %v770, %v772
        %v774 = vstv %s356
        %v775 = vmul.f32 %v726, %v774
        %v776 = vadd.f32 %v773, %v775
        %s777 = scalar_lea.vmem %s231, 24 [#allocation10]
        %778 = vst.msk [vmem:[%s777] sm:$0xff] %vm738, %v776
        %v779 = vstv %s357
        %v780 = vmul.f32 %v462, %v779
        %v781 = vstv %s358
        %v782 = vmul.f32 %v550, %v781
        %v783 = vadd.f32 %v780, %v782
        %v784 = vstv %s359
        %v785 = vmul.f32 %v638, %v784
        %v786 = vadd.f32 %v783, %v785
        %v787 = vstv %s360
        %v788 = vmul.f32 %v726, %v787
        %v789 = vadd.f32 %v786, %v788
        %s790 = scalar_lea.vmem %s231, 32 [#allocation10]
        %791 = vst.msk [vmem:[%s790] sm:$0xff] %vm738, %v789
        %v792 = vstv %s361
        %v793 = vmul.f32 %v462, %v792
        %v794 = vstv %s362
        %v795 = vmul.f32 %v550, %v794
        %v796 = vadd.f32 %v793, %v795
        %v797 = vstv %s363
        %v798 = vmul.f32 %v638, %v797
        %v799 = vadd.f32 %v796, %v798
        %v800 = vstv %s364
        %v801 = vmul.f32 %v726, %v800
        %v802 = vadd.f32 %v799, %v801
        %s803 = scalar_lea.vmem %s231, 40 [#allocation10]
        %804 = vst.msk [vmem:[%s803] sm:$0xff] %vm738, %v802
        %v805 = vstv %s365
        %v806 = vmul.f32 %v462, %v805
        %v807 = vstv %s366
        %v808 = vmul.f32 %v550, %v807
        %v809 = vadd.f32 %v806, %v808
        %v810 = vstv %s367
        %v811 = vmul.f32 %v638, %v810
        %v812 = vadd.f32 %v809, %v811
        %v813 = vstv %s368
        %v814 = vmul.f32 %v726, %v813
        %v815 = vadd.f32 %v812, %v814
        %s816 = scalar_lea.vmem %s231, 48 [#allocation10]
        %817 = vst.msk [vmem:[%s816] sm:$0xff] %vm738, %v815
        %v818 = vstv %s369
        %v819 = vmul.f32 %v462, %v818
        %v820 = vstv %s370
        %v821 = vmul.f32 %v550, %v820
        %v822 = vadd.f32 %v819, %v821
        %v823 = vstv %s371
        %v824 = vmul.f32 %v638, %v823
        %v825 = vadd.f32 %v822, %v824
        %v826 = vstv %s372
        %v827 = vmul.f32 %v726, %v826
        %v828 = vadd.f32 %v825, %v827
        %s829 = scalar_lea.vmem %s231, 56 [#allocation10]
        %830 = vst.msk [vmem:[%s829] sm:$0xff] %vm738, %v828
        %s831 = sand.u32 %s112, 1
        %s832 = scalar_lea.sflag [#allocation5], %s831
        %s833 = sand.u32 %s112, 1
        %s834 = smul.addr %s833, 64
        %s835 = scalar_lea.vmem [#allocation10], %s834
        // Predicated region
        $region49: #{tpu_custom_call.1} parent=31 // pred_check
          %p836 = pneg %p122
        $region50: #{tpu_custom_call.1} parent=31 // pred_check_branch
          %838 = sbr.rel (%p836) target = $region52
        $region51: #{tpu_custom_call.1} parent=31 // pred_region
          %840 = vsyncadd %s832, 0
          %s841 = smul.addr %s26, 16
          %s842 = sadd.s32 %s27, %s841
          %s843 = smul.addr %s842, 8
          %s844 = scalar_lea.hbm %s3, %s843
          %s845 = sshll.u32 %s835, 4
          %s846 = int_to_ptr.vmem [resolvable:$true] %s845
          %s847 = sshll.u32 %s844, 4
          %s848 = int_to_ptr.hbm [resolvable:$true] %s847
          %853 = dma.vmem_to_hbm [thread:$0]  %s846, 1024, %s848, %s832, 128, 256, 8
        $region52: #{tpu_custom_call.1} parent=31 // pred_fallthru
          _
      $region32: #{tpu_custom_call.1} parent=5 // pred_fallthru
        _
      %p854 = scmp.le.s32.totalorder 2, %s17
      // Predicated region
      $region53: #{tpu_custom_call.1} parent=5 // pred_check
        %p855 = pneg %p854
      $region54: #{tpu_custom_call.1} parent=5 // pred_check_branch
        %857 = sbr.rel (%p855) target = $region56
      $region55: #{tpu_custom_call.1} parent=5 // pred_region
        %s858 = ssub.s32 %s17, 2
        // Predicated region
        $region57: #{tpu_custom_call.1} parent=55 // pred_check
          %p859 = pneg %p128
        $region58: #{tpu_custom_call.1} parent=55 // pred_check_branch
          %861 = sbr.rel (%p859) target = $region60
        $region59: #{tpu_custom_call.1} parent=55 // pred_region
          %s862 = sand.u32 %s113, 1
          %s863 = scalar_lea.sflag [#allocation5], %s862
          %s864 = sand.u32 %s113, 1
          %s865 = smul.addr %s864, 64
          %s866 = scalar_lea.vmem [#allocation10], %s865
          %868 = dma.done %s863, 1024
        $region60: #{tpu_custom_call.1} parent=55 // pred_fallthru
          _
      $region56: #{tpu_custom_call.1} parent=5 // pred_fallthru
        _
    $region6: #{tpu_custom_call.1} parent=1 // loop_footer
      %s21 = sadd.s32 1, %s17
    $region7: #{tpu_custom_call.1} parent=1 // loop_footer_branch
      %16 = sbr.rel target = $region3
    $region8: #{tpu_custom_call.1} parent=1 // loop_exit
      _
    %869 = vsyncpa [#allocation4], 1
    %s870 = scalar_lea.sflag [#allocation4], 1
    %871 = vsyncpa %s870, 1
    %872 = vsyncpa [#allocation5], 1
    %s873 = scalar_lea.sflag [#allocation5], 1
    %874 = vsyncpa %s873, 1
    %875 = vsyncpa [#allocation6], 1
    %s876 = scalar_lea.sflag [#allocation6], 1
    %877 = vsyncpa %s876, 1
    %878 = vsyncpa [#allocation9], 1

</llo_original>
